<compile_context>
chip_gen: v6e
topology: v6e:2x2x1
jax: 0.10.0
libtpu: 0.0.40
codegen_flags: <defaults>
</compile_context>

<pallas_src>
import functools

import jax
import jax.numpy as jnp
import numpy as np
from jax.experimental import pallas as pl
from jax.experimental.pallas import tpu as pltpu

INPUT_SIZE = 24
HIDDEN = 64
FC1 = 32
FC2 = 32
OUT = 8
BN_EPS = 1e-5


def rnn_kernel(x_ref,                       # (B*T, 24) batch-major  (or (T*B,24) time-major fallback)
               wih_ref, whh_ref, b_ref,     # (24,256) (64,256) (1,256), gates [i,f,o,g], i/f/o cols pre-scaled 0.5
               fc1w_ref, fc1b_ref,          # (64,32) (1,32)
               fc2w_ref, fc2b_ref,          # (32,32) (1,32)   BatchNorm pre-folded
               fc3w_ref, fc3b_ref,          # (32,8)  (1,8)
               out_ref,                     # (B, 8)
               gx_ref,                      # VMEM scratch (B*T, 256)
               *, time_major):
    B = out_ref.shape[0]
    T = x_ref.shape[0] // B
    H = HIDDEN

    # Hoisted input projection: one well-shaped matmul + bias, stored to a VMEM
    # scratch so the unrolled recurrence only loads (B,4H) slices per step.
    gx_ref[...] = (jnp.dot(x_ref[...], wih_ref[...],
                           preferred_element_type=jnp.float32) + b_ref[...])

    h = jnp.zeros((B, H), jnp.float32)
    c = jnp.zeros((B, H), jnp.float32)

    # Fully unrolled recurrent loop (T is compile-time static).  All gate/state
    # math stays in f32 (v5e has no bf16 VPU/EUP path; 1e-3 check).
    for t in range(T):
        if time_major:
            # fallback layout: rows t*B .. t*B+B-1 (contiguous)
            gx_t = gx_ref[pl.ds(t * B, B), :]
        else:
            # batch-major layout: rows {b*T + t} — strided sublane read
            gx_t = gx_ref[pl.ds(t, B, stride=T), :]

        # W_hh read from its ref each step (no vreg pinning across the unroll).
        gates = gx_t + jnp.dot(h, whh_ref[...], preferred_element_type=jnp.float32)

        # One contiguous tanh slab for all four gates; i/f/o inputs were
        # pre-halved host-side, so sigmoid(z) = 0.5*tanh(z/2) + 0.5.
        t_all = jnp.tanh(gates)                       # (B, 4H) single EUP slab
        ifo = t_all[:, :3 * H] * 0.5 + 0.5            # cheap VPU affine
        i = ifo[:, 0 * H:1 * H]
        f = ifo[:, 1 * H:2 * H]
        o = ifo[:, 2 * H:3 * H]
        g = t_all[:, 3 * H:]

        c = f * c + i * g
        h = o * jnp.tanh(c)

    # MLP head (off the critical loop; BN folded into fc2, Dropout identity).
    y = jnp.dot(h, fc1w_ref[...], preferred_element_type=jnp.float32) + fc1b_ref[...]
    y = jnp.maximum(y, 0.0)
    y = jnp.dot(y, fc2w_ref[...], preferred_element_type=jnp.float32) + fc2b_ref[...]
    y = jnp.maximum(y, 0.0)
    out_ref[...] = jnp.dot(y, fc3w_ref[...], preferred_element_type=jnp.float32) + fc3b_ref[...]


def init_params(key):
    """Deterministic PyTorch-style initialization (BN stats made non-trivial)."""
    ks = jax.random.split(key, 14)
    k_lstm = 1.0 / np.sqrt(HIDDEN)

    def uni(k, shape, bound):
        return jax.random.uniform(k, shape, jnp.float32, -bound, bound)

    params = {
        # LSTM: W_ih (4H, 24), W_hh (4H, 64), b_ih (4H,), b_hh (4H,), order [i,f,g,o]
        "w_ih": uni(ks[0], (4 * HIDDEN, INPUT_SIZE), k_lstm),
        "w_hh": uni(ks[1], (4 * HIDDEN, HIDDEN), k_lstm),
        "b_ih": uni(ks[2], (4 * HIDDEN,), k_lstm),
        "b_hh": uni(ks[3], (4 * HIDDEN,), k_lstm),
        # fc1: Linear(64 -> 32)
        "fc1_w": uni(ks[4], (FC1, HIDDEN), 1.0 / np.sqrt(HIDDEN)),
        "fc1_b": uni(ks[5], (FC1,), 1.0 / np.sqrt(HIDDEN)),
        # BatchNorm1d(32) eval-mode parameters / running stats (non-trivial so
        # the folded-BN path is actually exercised by the correctness check).
        "bn_g": 0.5 + jax.random.uniform(ks[10], (FC1,), jnp.float32),
        "bn_b": jax.random.uniform(ks[11], (FC1,), jnp.float32, -0.5, 0.5),
        "bn_m": jax.random.uniform(ks[12], (FC1,), jnp.float32, -0.5, 0.5),
        "bn_v": 0.5 + jax.random.uniform(ks[13], (FC1,), jnp.float32),
        # fc2: Linear(32 -> 32)
        "fc2_w": uni(ks[6], (FC2, FC1), 1.0 / np.sqrt(FC1)),
        "fc2_b": uni(ks[7], (FC2,), 1.0 / np.sqrt(FC1)),
        # fc3: Linear(32 -> 8)
        "fc3_w": uni(ks[8], (OUT, FC2), 1.0 / np.sqrt(FC2)),
        "fc3_b": uni(ks[9], (OUT,), 1.0 / np.sqrt(FC2)),
    }
    return params


def _forward(x, p, *, fold_transpose):
    """x: (B, T, 24) batch_first float32 -> (B, 8)."""
    B, T, D = x.shape
    assert D == INPUT_SIZE
    H = HIDDEN

    x = x.astype(jnp.float32)
    # Keep the batch a multiple of 8 so per-step slices stay sublane-aligned.
    B_pad = -(-B // 8) * 8
    if B_pad != B:
        x = jnp.concatenate([x, jnp.zeros((B_pad - B, T, D), jnp.float32)], axis=0)

    if fold_transpose:
        # Batch-major flatten: layout-preserving (free) reshape — no transpose HLO.
        x2d = x.reshape(B_pad * T, D)                               # row b*T + t
    else:
        # Fallback: explicit wrapper-side time-major transpose.
        x2d = jnp.transpose(x, (1, 0, 2)).reshape(T * B_pad, D)     # row t*B + b

    # Repack gate blocks [i, f, g, o] -> [i, f, o, g] and pre-scale the i/f/o
    # columns by 0.5 so the kernel can use a single full-width tanh slab
    # (sigmoid(z) = 0.5*tanh(z/2) + 0.5).
    def repack(w):
        return jnp.concatenate([w[0 * H:1 * H], w[1 * H:2 * H],
                                w[3 * H:4 * H], w[2 * H:3 * H]], axis=0)

    gate_scale = jnp.concatenate([jnp.full((3 * H,), 0.5, jnp.float32),
                                  jnp.ones((H,), jnp.float32)])
    wih_t = repack(p["w_ih"]).T * gate_scale                       # (24, 256)
    whh_t = repack(p["w_hh"]).T * gate_scale                       # (64, 256)
    bias = (repack(p["b_ih"] + p["b_hh"]) * gate_scale).reshape(1, 4 * H)

    # Fold eval-mode BatchNorm into fc2 (BN is affine and directly precedes fc2).
    scale = p["bn_g"] * jax.lax.rsqrt(p["bn_v"] + BN_EPS)          # (32,)
    fc2w_t = scale[:, None] * p["fc2_w"].T                         # (32, 32)
    fc2b = p["fc2_b"] + (p["bn_b"] - p["bn_m"] * scale) @ p["fc2_w"].T

    args = (
        x2d,
        wih_t, whh_t, bias,
        p["fc1_w"].T, p["fc1_b"].reshape(1, FC1),
        fc2w_t, fc2b.reshape(1, FC2),
        p["fc3_w"].T, p["fc3_b"].reshape(1, OUT),
    )

    vmem = pl.BlockSpec(memory_space=pltpu.MemorySpace.VMEM)
    out = pl.pallas_call(
        functools.partial(rnn_kernel, time_major=not fold_transpose),
        out_shape=jax.ShapeDtypeStruct((B_pad, OUT), jnp.float32),
        in_specs=[vmem] * len(args),
        out_specs=vmem,
        scratch_shapes=[pltpu.VMEM((B_pad * T, 4 * H), jnp.float32)],
    )(*args)
    return out[:B]


def rnn_forward_pallas(x, p):
    # Primary path: batch-major input (no transpose HLO) + strided sublane reads
    # inside the kernel.  If a toolchain rejects strided `pl.ds` loads, fall
    # back to the pre-transposed time-major layout (identical semantics).
    try:
        return jax.block_until_ready(_forward(x, p, fold_transpose=True))
    except Exception:  # pragma: no cover - only hit if strided loads unsupported
        return jax.block_until_ready(_forward(x, p, fold_transpose=False))


def rnn_forward_ref(x, p):
    """Pure-JAX reference with identical semantics (explicit BN, PyTorch gate order)."""
    B, T, _ = x.shape
    wih_t, whh_t = p["w_ih"].T, p["w_hh"].T
    bias = (p["b_ih"] + p["b_hh"]).reshape(1, -1)
    H = HIDDEN

    def step(carry, x_t):
        h, c = carry
        gates = x_t @ wih_t + h @ whh_t + bias
        i = jax.nn.sigmoid(gates[:, 0 * H:1 * H])
        f = jax.nn.sigmoid(gates[:, 1 * H:2 * H])
        g = jnp.tanh(gates[:, 2 * H:3 * H])
        o = jax.nn.sigmoid(gates[:, 3 * H:4 * H])
        c_new = f * c + i * g
        h_new = o * jnp.tanh(c_new)
        return (h_new, c_new), None

    (h, _), _ = jax.lax.scan(step, (jnp.zeros((B, H)), jnp.zeros((B, H))),
                             jnp.transpose(x, (1, 0, 2)))
    y = jnp.maximum(h @ p["fc1_w"].T + p["fc1_b"], 0.0)
    y = (y - p["bn_m"]) * (p["bn_g"] / jnp.sqrt(p["bn_v"] + BN_EPS)) + p["bn_b"]
    y = jnp.maximum(y @ p["fc2_w"].T + p["fc2_b"], 0.0)
    return y @ p["fc3_w"].T + p["fc3_b"]


if __name__ == "__main__":
    key = jax.random.PRNGKey(0)
    k_param, k_x = jax.random.split(key)

    params = init_params(k_param)
    B, T = 8, 8
    x = jax.random.normal(k_x, (B, T, INPUT_SIZE), jnp.float32)

    out = rnn_forward_pallas(x, params)
    ref = jax.block_until_ready(rnn_forward_ref(x, params))
    np.testing.assert_allclose(np.asarray(out), np.asarray(ref), rtol=1e-3, atol=1e-3)

    print("KERNEL_OK")
</pallas_src>

<mosaic_0001>
module attributes {stable_mosaic.version = 11 : i64} {
  func.func @rnn_kernel(%arg0: memref<64x24xf32, #tpu.memory_space<vmem>>, %arg1: memref<24x256xf32, #tpu.memory_space<vmem>>, %arg2: memref<64x256xf32, #tpu.memory_space<vmem>>, %arg3: memref<1x256xf32, #tpu.memory_space<vmem>>, %arg4: memref<64x32xf32, #tpu.memory_space<vmem>>, %arg5: memref<1x32xf32, #tpu.memory_space<vmem>>, %arg6: memref<32x32xf32, #tpu.memory_space<vmem>>, %arg7: memref<1x32xf32, #tpu.memory_space<vmem>>, %arg8: memref<32x8xf32, #tpu.memory_space<vmem>>, %arg9: memref<1x8xf32, #tpu.memory_space<vmem>>, %arg10: memref<8x8xf32, #tpu.memory_space<vmem>>, %arg11: memref<64x256xf32, #tpu.memory_space<vmem>>) attributes {dimension_semantics = [], scalar_prefetch = 0 : i64, scratch_operands = 1 : i64, tpu.core_type = #tpu.core_type<tc>} {
    %c0 = arith.constant 0 : index
    %c0_0 = arith.constant 0 : index
    %0 = vector.load %arg0[%c0, %c0_0] : memref<64x24xf32, #tpu.memory_space<vmem>>, vector<64x24xf32>
    %c0_1 = arith.constant 0 : index
    %c0_2 = arith.constant 0 : index
    %1 = vector.load %arg1[%c0_1, %c0_2] : memref<24x256xf32, #tpu.memory_space<vmem>>, vector<24x256xf32>
    %cst = arith.constant dense<0.000000e+00> : vector<64x256xf32>
    %2 = tpu.matmul %0, %1, %cst {dimension_numbers = #tpu.dot_dimension_numbers<[1], [0], [0], [1], [0, 0, 1, 1], [], []>} : vector<64x24xf32>, vector<24x256xf32>, vector<64x256xf32> -> vector<64x256xf32>
    %c0_3 = arith.constant 0 : index
    %c0_4 = arith.constant 0 : index
    %3 = vector.load %arg3[%c0_3, %c0_4] : memref<1x256xf32, #tpu.memory_space<vmem>>, vector<1x256xf32>
    %4 = vector.broadcast %3 : vector<1x256xf32> to vector<64x256xf32>
    %5 = arith.addf %2, %4 : vector<64x256xf32>
    %c0_5 = arith.constant 0 : index
    %c0_6 = arith.constant 0 : index
    %6 = vector.load %arg11[%c0_5, %c0_6] : memref<64x256xf32, #tpu.memory_space<vmem>>, vector<64x256xf32>
    tpu.vector_store %arg11[%c0_5, %c0_6], %5 {strides = array<i32>} : memref<64x256xf32, #tpu.memory_space<vmem>>, vector<64x256xf32>,
    %cst_7 = arith.constant 0.000000e+00 : f32
    %7 = vector.broadcast %cst_7 : f32 to vector<8x64xf32>
    %cst_8 = arith.constant 0.000000e+00 : f32
    %8 = vector.broadcast %cst_8 : f32 to vector<8x64xf32>
    %c0_9 = arith.constant 0 : index
    %c0_10 = arith.constant 0 : index
    %9 = tpu.strided_load %arg11[%c0_9, %c0_10] {strides = array<i32: 8, 1>} : memref<64x256xf32, #tpu.memory_space<vmem>>, vector<8x256xf32>
    %c0_11 = arith.constant 0 : index
    %c0_12 = arith.constant 0 : index
    %10 = vector.load %arg2[%c0_11, %c0_12] : memref<64x256xf32, #tpu.memory_space<vmem>>, vector<64x256xf32>
    %cst_13 = arith.constant dense<0.000000e+00> : vector<8x256xf32>
    %11 = tpu.matmul %7, %10, %cst_13 {dimension_numbers = #tpu.dot_dimension_numbers<[1], [0], [0], [1], [0, 0, 1, 1], [], []>} : vector<8x64xf32>, vector<64x256xf32>, vector<8x256xf32> -> vector<8x256xf32>
    %12 = arith.addf %9, %11 : vector<8x256xf32>
    %13 = math.tanh %12 : vector<8x256xf32>
    %14 = vector.extract_strided_slice %13 {offsets = [0, 0], sizes = [8, 192], strides = [1, 1]} : vector<8x256xf32> to vector<8x192xf32>
    %cst_14 = arith.constant 5.000000e-01 : f32
    %15 = vector.broadcast %cst_14 : f32 to vector<8x192xf32>
    %16 = arith.mulf %14, %15 : vector<8x192xf32>
    %cst_15 = arith.constant 5.000000e-01 : f32
    %17 = vector.broadcast %cst_15 : f32 to vector<8x192xf32>
    %18 = arith.addf %16, %17 : vector<8x192xf32>
    %19 = vector.extract_strided_slice %18 {offsets = [0, 0], sizes = [8, 64], strides = [1, 1]} : vector<8x192xf32> to vector<8x64xf32>
    %20 = vector.extract_strided_slice %18 {offsets = [0, 64], sizes = [8, 64], strides = [1, 1]} : vector<8x192xf32> to vector<8x64xf32>
    %21 = vector.extract_strided_slice %18 {offsets = [0, 128], sizes = [8, 64], strides = [1, 1]} : vector<8x192xf32> to vector<8x64xf32>
    %22 = vector.extract_strided_slice %13 {offsets = [0, 192], sizes = [8, 64], strides = [1, 1]} : vector<8x256xf32> to vector<8x64xf32>
    %23 = arith.mulf %20, %8 : vector<8x64xf32>
    %24 = arith.mulf %19, %22 : vector<8x64xf32>
    %25 = arith.addf %23, %24 : vector<8x64xf32>
    %26 = math.tanh %25 : vector<8x64xf32>
    %27 = arith.mulf %21, %26 : vector<8x64xf32>
    %c1 = arith.constant 1 : index
    %c0_16 = arith.constant 0 : index
    %28 = tpu.strided_load %arg11[%c1, %c0_16] {strides = array<i32: 8, 1>} : memref<64x256xf32, #tpu.memory_space<vmem>>, vector<8x256xf32>
    %c0_17 = arith.constant 0 : index
    %c0_18 = arith.constant 0 : index
    %29 = vector.load %arg2[%c0_17, %c0_18] : memref<64x256xf32, #tpu.memory_space<vmem>>, vector<64x256xf32>
    %cst_19 = arith.constant dense<0.000000e+00> : vector<8x256xf32>
    %30 = tpu.matmul %27, %29, %cst_19 {dimension_numbers = #tpu.dot_dimension_numbers<[1], [0], [0], [1], [0, 0, 1, 1], [], []>} : vector<8x64xf32>, vector<64x256xf32>, vector<8x256xf32> -> vector<8x256xf32>
    %31 = arith.addf %28, %30 : vector<8x256xf32>
    %32 = math.tanh %31 : vector<8x256xf32>
    %33 = vector.extract_strided_slice %32 {offsets = [0, 0], sizes = [8, 192], strides = [1, 1]} : vector<8x256xf32> to vector<8x192xf32>
    %cst_20 = arith.constant 5.000000e-01 : f32
    %34 = vector.broadcast %cst_20 : f32 to vector<8x192xf32>
    %35 = arith.mulf %33, %34 : vector<8x192xf32>
    %cst_21 = arith.constant 5.000000e-01 : f32
    %36 = vector.broadcast %cst_21 : f32 to vector<8x192xf32>
    %37 = arith.addf %35, %36 : vector<8x192xf32>
    %38 = vector.extract_strided_slice %37 {offsets = [0, 0], sizes = [8, 64], strides = [1, 1]} : vector<8x192xf32> to vector<8x64xf32>
    %39 = vector.extract_strided_slice %37 {offsets = [0, 64], sizes = [8, 64], strides = [1, 1]} : vector<8x192xf32> to vector<8x64xf32>
    %40 = vector.extract_strided_slice %37 {offsets = [0, 128], sizes = [8, 64], strides = [1, 1]} : vector<8x192xf32> to vector<8x64xf32>
    %41 = vector.extract_strided_slice %32 {offsets = [0, 192], sizes = [8, 64], strides = [1, 1]} : vector<8x256xf32> to vector<8x64xf32>
    %42 = arith.mulf %39, %25 : vector<8x64xf32>
    %43 = arith.mulf %38, %41 : vector<8x64xf32>
    %44 = arith.addf %42, %43 : vector<8x64xf32>
    %45 = math.tanh %44 : vector<8x64xf32>
    %46 = arith.mulf %40, %45 : vector<8x64xf32>
    %c2 = arith.constant 2 : index
    %c0_22 = arith.constant 0 : index
    %47 = tpu.strided_load %arg11[%c2, %c0_22] {strides = array<i32: 8, 1>} : memref<64x256xf32, #tpu.memory_space<vmem>>, vector<8x256xf32>
    %c0_23 = arith.constant 0 : index
    %c0_24 = arith.constant 0 : index
    %48 = vector.load %arg2[%c0_23, %c0_24] : memref<64x256xf32, #tpu.memory_space<vmem>>, vector<64x256xf32>
    %cst_25 = arith.constant dense<0.000000e+00> : vector<8x256xf32>
    %49 = tpu.matmul %46, %48, %cst_25 {dimension_numbers = #tpu.dot_dimension_numbers<[1], [0], [0], [1], [0, 0, 1, 1], [], []>} : vector<8x64xf32>, vector<64x256xf32>, vector<8x256xf32> -> vector<8x256xf32>
    %50 = arith.addf %47, %49 : vector<8x256xf32>
    %51 = math.tanh %50 : vector<8x256xf32>
    %52 = vector.extract_strided_slice %51 {offsets = [0, 0], sizes = [8, 192], strides = [1, 1]} : vector<8x256xf32> to vector<8x192xf32>
    %cst_26 = arith.constant 5.000000e-01 : f32
    %53 = vector.broadcast %cst_26 : f32 to vector<8x192xf32>
    %54 = arith.mulf %52, %53 : vector<8x192xf32>
    %cst_27 = arith.constant 5.000000e-01 : f32
    %55 = vector.broadcast %cst_27 : f32 to vector<8x192xf32>
    %56 = arith.addf %54, %55 : vector<8x192xf32>
    %57 = vector.extract_strided_slice %56 {offsets = [0, 0], sizes = [8, 64], strides = [1, 1]} : vector<8x192xf32> to vector<8x64xf32>
    %58 = vector.extract_strided_slice %56 {offsets = [0, 64], sizes = [8, 64], strides = [1, 1]} : vector<8x192xf32> to vector<8x64xf32>
    %59 = vector.extract_strided_slice %56 {offsets = [0, 128], sizes = [8, 64], strides = [1, 1]} : vector<8x192xf32> to vector<8x64xf32>
    %60 = vector.extract_strided_slice %51 {offsets = [0, 192], sizes = [8, 64], strides = [1, 1]} : vector<8x256xf32> to vector<8x64xf32>
    %61 = arith.mulf %58, %44 : vector<8x64xf32>
    %62 = arith.mulf %57, %60 : vector<8x64xf32>
    %63 = arith.addf %61, %62 : vector<8x64xf32>
    %64 = math.tanh %63 : vector<8x64xf32>
    %65 = arith.mulf %59, %64 : vector<8x64xf32>
    %c3 = arith.constant 3 : index
    %c0_28 = arith.constant 0 : index
    %66 = tpu.strided_load %arg11[%c3, %c0_28] {strides = array<i32: 8, 1>} : memref<64x256xf32, #tpu.memory_space<vmem>>, vector<8x256xf32>
    %c0_29 = arith.constant 0 : index
    %c0_30 = arith.constant 0 : index
    %67 = vector.load %arg2[%c0_29, %c0_30] : memref<64x256xf32, #tpu.memory_space<vmem>>, vector<64x256xf32>
    %cst_31 = arith.constant dense<0.000000e+00> : vector<8x256xf32>
    %68 = tpu.matmul %65, %67, %cst_31 {dimension_numbers = #tpu.dot_dimension_numbers<[1], [0], [0], [1], [0, 0, 1, 1], [], []>} : vector<8x64xf32>, vector<64x256xf32>, vector<8x256xf32> -> vector<8x256xf32>
    %69 = arith.addf %66, %68 : vector<8x256xf32>
    %70 = math.tanh %69 : vector<8x256xf32>
    %71 = vector.extract_strided_slice %70 {offsets = [0, 0], sizes = [8, 192], strides = [1, 1]} : vector<8x256xf32> to vector<8x192xf32>
    %cst_32 = arith.constant 5.000000e-01 : f32
    %72 = vector.broadcast %cst_32 : f32 to vector<8x192xf32>
    %73 = arith.mulf %71, %72 : vector<8x192xf32>
    %cst_33 = arith.constant 5.000000e-01 : f32
    %74 = vector.broadcast %cst_33 : f32 to vector<8x192xf32>
    %75 = arith.addf %73, %74 : vector<8x192xf32>
    %76 = vector.extract_strided_slice %75 {offsets = [0, 0], sizes = [8, 64], strides = [1, 1]} : vector<8x192xf32> to vector<8x64xf32>
    %77 = vector.extract_strided_slice %75 {offsets = [0, 64], sizes = [8, 64], strides = [1, 1]} : vector<8x192xf32> to vector<8x64xf32>
    %78 = vector.extract_strided_slice %75 {offsets = [0, 128], sizes = [8, 64], strides = [1, 1]} : vector<8x192xf32> to vector<8x64xf32>
    %79 = vector.extract_strided_slice %70 {offsets = [0, 192], sizes = [8, 64], strides = [1, 1]} : vector<8x256xf32> to vector<8x64xf32>
    %80 = arith.mulf %77, %63 : vector<8x64xf32>
    %81 = arith.mulf %76, %79 : vector<8x64xf32>
    %82 = arith.addf %80, %81 : vector<8x64xf32>
    %83 = math.tanh %82 : vector<8x64xf32>
    %84 = arith.mulf %78, %83 : vector<8x64xf32>
    %c4 = arith.constant 4 : index
    %c0_34 = arith.constant 0 : index
    %85 = tpu.strided_load %arg11[%c4, %c0_34] {strides = array<i32: 8, 1>} : memref<64x256xf32, #tpu.memory_space<vmem>>, vector<8x256xf32>
    %c0_35 = arith.constant 0 : index
    %c0_36 = arith.constant 0 : index
    %86 = vector.load %arg2[%c0_35, %c0_36] : memref<64x256xf32, #tpu.memory_space<vmem>>, vector<64x256xf32>
    %cst_37 = arith.constant dense<0.000000e+00> : vector<8x256xf32>
    %87 = tpu.matmul %84, %86, %cst_37 {dimension_numbers = #tpu.dot_dimension_numbers<[1], [0], [0], [1], [0, 0, 1, 1], [], []>} : vector<8x64xf32>, vector<64x256xf32>, vector<8x256xf32> -> vector<8x256xf32>
    %88 = arith.addf %85, %87 : vector<8x256xf32>
    %89 = math.tanh %88 : vector<8x256xf32>
    %90 = vector.extract_strided_slice %89 {offsets = [0, 0], sizes = [8, 192], strides = [1, 1]} : vector<8x256xf32> to vector<8x192xf32>
    %cst_38 = arith.constant 5.000000e-01 : f32
    %91 = vector.broadcast %cst_38 : f32 to vector<8x192xf32>
    %92 = arith.mulf %90, %91 : vector<8x192xf32>
    %cst_39 = arith.constant 5.000000e-01 : f32
    %93 = vector.broadcast %cst_39 : f32 to vector<8x192xf32>
    %94 = arith.addf %92, %93 : vector<8x192xf32>
    %95 = vector.extract_strided_slice %94 {offsets = [0, 0], sizes = [8, 64], strides = [1, 1]} : vector<8x192xf32> to vector<8x64xf32>
    %96 = vector.extract_strided_slice %94 {offsets = [0, 64], sizes = [8, 64], strides = [1, 1]} : vector<8x192xf32> to vector<8x64xf32>
    %97 = vector.extract_strided_slice %94 {offsets = [0, 128], sizes = [8, 64], strides = [1, 1]} : vector<8x192xf32> to vector<8x64xf32>
    %98 = vector.extract_strided_slice %89 {offsets = [0, 192], sizes = [8, 64], strides = [1, 1]} : vector<8x256xf32> to vector<8x64xf32>
    %99 = arith.mulf %96, %82 : vector<8x64xf32>
    %100 = arith.mulf %95, %98 : vector<8x64xf32>
    %101 = arith.addf %99, %100 : vector<8x64xf32>
    %102 = math.tanh %101 : vector<8x64xf32>
    %103 = arith.mulf %97, %102 : vector<8x64xf32>
    %c5 = arith.constant 5 : index
    %c0_40 = arith.constant 0 : index
    %104 = tpu.strided_load %arg11[%c5, %c0_40] {strides = array<i32: 8, 1>} : memref<64x256xf32, #tpu.memory_space<vmem>>, vector<8x256xf32>
    %c0_41 = arith.constant 0 : index
    %c0_42 = arith.constant 0 : index
    %105 = vector.load %arg2[%c0_41, %c0_42] : memref<64x256xf32, #tpu.memory_space<vmem>>, vector<64x256xf32>
    %cst_43 = arith.constant dense<0.000000e+00> : vector<8x256xf32>
    %106 = tpu.matmul %103, %105, %cst_43 {dimension_numbers = #tpu.dot_dimension_numbers<[1], [0], [0], [1], [0, 0, 1, 1], [], []>} : vector<8x64xf32>, vector<64x256xf32>, vector<8x256xf32> -> vector<8x256xf32>
    %107 = arith.addf %104, %106 : vector<8x256xf32>
    %108 = math.tanh %107 : vector<8x256xf32>
    %109 = vector.extract_strided_slice %108 {offsets = [0, 0], sizes = [8, 192], strides = [1, 1]} : vector<8x256xf32> to vector<8x192xf32>
    %cst_44 = arith.constant 5.000000e-01 : f32
    %110 = vector.broadcast %cst_44 : f32 to vector<8x192xf32>
    %111 = arith.mulf %109, %110 : vector<8x192xf32>
    %cst_45 = arith.constant 5.000000e-01 : f32
    %112 = vector.broadcast %cst_45 : f32 to vector<8x192xf32>
    %113 = arith.addf %111, %112 : vector<8x192xf32>
    %114 = vector.extract_strided_slice %113 {offsets = [0, 0], sizes = [8, 64], strides = [1, 1]} : vector<8x192xf32> to vector<8x64xf32>
    %115 = vector.extract_strided_slice %113 {offsets = [0, 64], sizes = [8, 64], strides = [1, 1]} : vector<8x192xf32> to vector<8x64xf32>
    %116 = vector.extract_strided_slice %113 {offsets = [0, 128], sizes = [8, 64], strides = [1, 1]} : vector<8x192xf32> to vector<8x64xf32>
    %117 = vector.extract_strided_slice %108 {offsets = [0, 192], sizes = [8, 64], strides = [1, 1]} : vector<8x256xf32> to vector<8x64xf32>
    %118 = arith.mulf %115, %101 : vector<8x64xf32>
    %119 = arith.mulf %114, %117 : vector<8x64xf32>
    %120 = arith.addf %118, %119 : vector<8x64xf32>
    %121 = math.tanh %120 : vector<8x64xf32>
    %122 = arith.mulf %116, %121 : vector<8x64xf32>
    %c6 = arith.constant 6 : index
    %c0_46 = arith.constant 0 : index
    %123 = tpu.strided_load %arg11[%c6, %c0_46] {strides = array<i32: 8, 1>} : memref<64x256xf32, #tpu.memory_space<vmem>>, vector<8x256xf32>
    %c0_47 = arith.constant 0 : index
    %c0_48 = arith.constant 0 : index
    %124 = vector.load %arg2[%c0_47, %c0_48] : memref<64x256xf32, #tpu.memory_space<vmem>>, vector<64x256xf32>
    %cst_49 = arith.constant dense<0.000000e+00> : vector<8x256xf32>
    %125 = tpu.matmul %122, %124, %cst_49 {dimension_numbers = #tpu.dot_dimension_numbers<[1], [0], [0], [1], [0, 0, 1, 1], [], []>} : vector<8x64xf32>, vector<64x256xf32>, vector<8x256xf32> -> vector<8x256xf32>
    %126 = arith.addf %123, %125 : vector<8x256xf32>
    %127 = math.tanh %126 : vector<8x256xf32>
    %128 = vector.extract_strided_slice %127 {offsets = [0, 0], sizes = [8, 192], strides = [1, 1]} : vector<8x256xf32> to vector<8x192xf32>
    %cst_50 = arith.constant 5.000000e-01 : f32
    %129 = vector.broadcast %cst_50 : f32 to vector<8x192xf32>
    %130 = arith.mulf %128, %129 : vector<8x192xf32>
    %cst_51 = arith.constant 5.000000e-01 : f32
    %131 = vector.broadcast %cst_51 : f32 to vector<8x192xf32>
    %132 = arith.addf %130, %131 : vector<8x192xf32>
    %133 = vector.extract_strided_slice %132 {offsets = [0, 0], sizes = [8, 64], strides = [1, 1]} : vector<8x192xf32> to vector<8x64xf32>
    %134 = vector.extract_strided_slice %132 {offsets = [0, 64], sizes = [8, 64], strides = [1, 1]} : vector<8x192xf32> to vector<8x64xf32>
    %135 = vector.extract_strided_slice %132 {offsets = [0, 128], sizes = [8, 64], strides = [1, 1]} : vector<8x192xf32> to vector<8x64xf32>
    %136 = vector.extract_strided_slice %127 {offsets = [0, 192], sizes = [8, 64], strides = [1, 1]} : vector<8x256xf32> to vector<8x64xf32>
    %137 = arith.mulf %134, %120 : vector<8x64xf32>
    %138 = arith.mulf %133, %136 : vector<8x64xf32>
    %139 = arith.addf %137, %138 : vector<8x64xf32>
    %140 = math.tanh %139 : vector<8x64xf32>
    %141 = arith.mulf %135, %140 : vector<8x64xf32>
    %c7 = arith.constant 7 : index
    %c0_52 = arith.constant 0 : index
    %142 = tpu.strided_load %arg11[%c7, %c0_52] {strides = array<i32: 8, 1>} : memref<64x256xf32, #tpu.memory_space<vmem>>, vector<8x256xf32>
    %c0_53 = arith.constant 0 : index
    %c0_54 = arith.constant 0 : index
    %143 = vector.load %arg2[%c0_53, %c0_54] : memref<64x256xf32, #tpu.memory_space<vmem>>, vector<64x256xf32>
    %cst_55 = arith.constant dense<0.000000e+00> : vector<8x256xf32>
    %144 = tpu.matmul %141, %143, %cst_55 {dimension_numbers = #tpu.dot_dimension_numbers<[1], [0], [0], [1], [0, 0, 1, 1], [], []>} : vector<8x64xf32>, vector<64x256xf32>, vector<8x256xf32> -> vector<8x256xf32>
    %145 = arith.addf %142, %144 : vector<8x256xf32>
    %146 = math.tanh %145 : vector<8x256xf32>
    %147 = vector.extract_strided_slice %146 {offsets = [0, 0], sizes = [8, 192], strides = [1, 1]} : vector<8x256xf32> to vector<8x192xf32>
    %cst_56 = arith.constant 5.000000e-01 : f32
    %148 = vector.broadcast %cst_56 : f32 to vector<8x192xf32>
    %149 = arith.mulf %147, %148 : vector<8x192xf32>
    %cst_57 = arith.constant 5.000000e-01 : f32
    %150 = vector.broadcast %cst_57 : f32 to vector<8x192xf32>
    %151 = arith.addf %149, %150 : vector<8x192xf32>
    %152 = vector.extract_strided_slice %151 {offsets = [0, 0], sizes = [8, 64], strides = [1, 1]} : vector<8x192xf32> to vector<8x64xf32>
    %153 = vector.extract_strided_slice %151 {offsets = [0, 64], sizes = [8, 64], strides = [1, 1]} : vector<8x192xf32> to vector<8x64xf32>
    %154 = vector.extract_strided_slice %151 {offsets = [0, 128], sizes = [8, 64], strides = [1, 1]} : vector<8x192xf32> to vector<8x64xf32>
    %155 = vector.extract_strided_slice %146 {offsets = [0, 192], sizes = [8, 64], strides = [1, 1]} : vector<8x256xf32> to vector<8x64xf32>
    %156 = arith.mulf %153, %139 : vector<8x64xf32>
    %157 = arith.mulf %152, %155 : vector<8x64xf32>
    %158 = arith.addf %156, %157 : vector<8x64xf32>
    %159 = math.tanh %158 : vector<8x64xf32>
    %160 = arith.mulf %154, %159 : vector<8x64xf32>
    %c0_58 = arith.constant 0 : index
    %c0_59 = arith.constant 0 : index
    %161 = vector.load %arg4[%c0_58, %c0_59] : memref<64x32xf32, #tpu.memory_space<vmem>>, vector<64x32xf32>
    %cst_60 = arith.constant dense<0.000000e+00> : vector<8x32xf32>
    %162 = tpu.matmul %160, %161, %cst_60 {dimension_numbers = #tpu.dot_dimension_numbers<[1], [0], [0], [1], [0, 0, 1, 1], [], []>} : vector<8x64xf32>, vector<64x32xf32>, vector<8x32xf32> -> vector<8x32xf32>
    %c0_61 = arith.constant 0 : index
    %c0_62 = arith.constant 0 : index
    %163 = vector.load %arg5[%c0_61, %c0_62] : memref<1x32xf32, #tpu.memory_space<vmem>>, vector<1x32xf32>
    %164 = vector.broadcast %163 : vector<1x32xf32> to vector<8x32xf32>
    %165 = arith.addf %162, %164 : vector<8x32xf32>
    %cst_63 = arith.constant 0.000000e+00 : f32
    %166 = vector.broadcast %cst_63 : f32 to vector<8x32xf32>
    %167 = arith.maximumf %165, %166 : vector<8x32xf32>
    %c0_64 = arith.constant 0 : index
    %c0_65 = arith.constant 0 : index
    %168 = vector.load %arg6[%c0_64, %c0_65] : memref<32x32xf32, #tpu.memory_space<vmem>>, vector<32x32xf32>
    %cst_66 = arith.constant dense<0.000000e+00> : vector<8x32xf32>
    %169 = tpu.matmul %167, %168, %cst_66 {dimension_numbers = #tpu.dot_dimension_numbers<[1], [0], [0], [1], [0, 0, 1, 1], [], []>} : vector<8x32xf32>, vector<32x32xf32>, vector<8x32xf32> -> vector<8x32xf32>
    %c0_67 = arith.constant 0 : index
    %c0_68 = arith.constant 0 : index
    %170 = vector.load %arg7[%c0_67, %c0_68] : memref<1x32xf32, #tpu.memory_space<vmem>>, vector<1x32xf32>
    %171 = vector.broadcast %170 : vector<1x32xf32> to vector<8x32xf32>
    %172 = arith.addf %169, %171 : vector<8x32xf32>
    %cst_69 = arith.constant 0.000000e+00 : f32
    %173 = vector.broadcast %cst_69 : f32 to vector<8x32xf32>
    %174 = arith.maximumf %172, %173 : vector<8x32xf32>
    %c0_70 = arith.constant 0 : index
    %c0_71 = arith.constant 0 : index
    %175 = vector.load %arg8[%c0_70, %c0_71] : memref<32x8xf32, #tpu.memory_space<vmem>>, vector<32x8xf32>
    %cst_72 = arith.constant dense<0.000000e+00> : vector<8x8xf32>
    %176 = tpu.matmul %174, %175, %cst_72 {dimension_numbers = #tpu.dot_dimension_numbers<[1], [0], [0], [1], [0, 0, 1, 1], [], []>} : vector<8x32xf32>, vector<32x8xf32>, vector<8x8xf32> -> vector<8x8xf32>
    %c0_73 = arith.constant 0 : index
    %c0_74 = arith.constant 0 : index
    %177 = vector.load %arg9[%c0_73, %c0_74] : memref<1x8xf32, #tpu.memory_space<vmem>>, vector<1x8xf32>
    %178 = vector.broadcast %177 : vector<1x8xf32> to vector<8x8xf32>
    %179 = arith.addf %176, %178 : vector<8x8xf32>
    %c0_75 = arith.constant 0 : index
    %c0_76 = arith.constant 0 : index
    %180 = vector.load %arg10[%c0_75, %c0_76] : memref<8x8xf32, #tpu.memory_space<vmem>>, vector<8x8xf32>
    tpu.vector_store %arg10[%c0_75, %c0_76], %179 {strides = array<i32>} : memref<8x8xf32, #tpu.memory_space<vmem>>, vector<8x8xf32>,
    return
  }
}

module attributes {stable_mosaic.version = 11 : i64} {
  func.func @rnn_kernel(%arg0: memref<64x24xf32, #tpu.memory_space<vmem>>, %arg1: memref<24x256xf32, #tpu.memory_space<vmem>>, %arg2: memref<64x256xf32, #tpu.memory_space<vmem>>, %arg3: memref<1x256xf32, #tpu.memory_space<vmem>>, %arg4: memref<64x32xf32, #tpu.memory_space<vmem>>, %arg5: memref<1x32xf32, #tpu.memory_space<vmem>>, %arg6: memref<32x32xf32, #tpu.memory_space<vmem>>, %arg7: memref<1x32xf32, #tpu.memory_space<vmem>>, %arg8: memref<32x8xf32, #tpu.memory_space<vmem>>, %arg9: memref<1x8xf32, #tpu.memory_space<vmem>>, %arg10: memref<8x8xf32, #tpu.memory_space<vmem>>, %arg11: memref<64x256xf32, #tpu.memory_space<vmem>>) attributes {dimension_semantics = [], scalar_prefetch = 0 : i64, scratch_operands = 1 : i64, tpu.core_type = #tpu.core_type<tc>} {
    %c0 = arith.constant 0 : index
    %c0_0 = arith.constant 0 : index
    %0 = vector.load %arg0[%c0, %c0_0] : memref<64x24xf32, #tpu.memory_space<vmem>>, vector<64x24xf32>
    %c0_1 = arith.constant 0 : index
    %c0_2 = arith.constant 0 : index
    %1 = vector.load %arg1[%c0_1, %c0_2] : memref<24x256xf32, #tpu.memory_space<vmem>>, vector<24x256xf32>
    %cst = arith.constant dense<0.000000e+00> : vector<64x256xf32>
    %2 = tpu.matmul %0, %1, %cst {dimension_numbers = #tpu.dot_dimension_numbers<[1], [0], [0], [1], [0, 0, 1, 1], [], []>} : vector<64x24xf32>, vector<24x256xf32>, vector<64x256xf32> -> vector<64x256xf32>
    %c0_3 = arith.constant 0 : index
    %c0_4 = arith.constant 0 : index
    %3 = vector.load %arg3[%c0_3, %c0_4] : memref<1x256xf32, #tpu.memory_space<vmem>>, vector<1x256xf32>
    %4 = vector.broadcast %3 : vector<1x256xf32> to vector<64x256xf32>
    %5 = arith.addf %2, %4 : vector<64x256xf32>
    %c0_5 = arith.constant 0 : index
    %c0_6 = arith.constant 0 : index
    %6 = vector.load %arg11[%c0_5, %c0_6] : memref<64x256xf32, #tpu.memory_space<vmem>>, vector<64x256xf32>
    tpu.vector_store %arg11[%c0_5, %c0_6], %5 {strides = array<i32>} : memref<64x256xf32, #tpu.memory_space<vmem>>, vector<64x256xf32>,
    %cst_7 = arith.constant 0.000000e+00 : f32
    %7 = vector.broadcast %cst_7 : f32 to vector<8x64xf32>
    %cst_8 = arith.constant 0.000000e+00 : f32
    %8 = vector.broadcast %cst_8 : f32 to vector<8x64xf32>
    %c0_9 = arith.constant 0 : index
    %c0_10 = arith.constant 0 : index
    %9 = vector.load %arg11[%c0_9, %c0_10] : memref<64x256xf32, #tpu.memory_space<vmem>>, vector<8x256xf32>
    %c0_11 = arith.constant 0 : index
    %c0_12 = arith.constant 0 : index
    %10 = vector.load %arg2[%c0_11, %c0_12] : memref<64x256xf32, #tpu.memory_space<vmem>>, vector<64x256xf32>
    %cst_13 = arith.constant dense<0.000000e+00> : vector<8x256xf32>
    %11 = tpu.matmul %7, %10, %cst_13 {dimension_numbers = #tpu.dot_dimension_numbers<[1], [0], [0], [1], [0, 0, 1, 1], [], []>} : vector<8x64xf32>, vector<64x256xf32>, vector<8x256xf32> -> vector<8x256xf32>
    %12 = arith.addf %9, %11 : vector<8x256xf32>
    %13 = math.tanh %12 : vector<8x256xf32>
    %14 = vector.extract_strided_slice %13 {offsets = [0, 0], sizes = [8, 192], strides = [1, 1]} : vector<8x256xf32> to vector<8x192xf32>
    %cst_14 = arith.constant 5.000000e-01 : f32
    %15 = vector.broadcast %cst_14 : f32 to vector<8x192xf32>
    %16 = arith.mulf %14, %15 : vector<8x192xf32>
    %cst_15 = arith.constant 5.000000e-01 : f32
    %17 = vector.broadcast %cst_15 : f32 to vector<8x192xf32>
    %18 = arith.addf %16, %17 : vector<8x192xf32>
    %19 = vector.extract_strided_slice %18 {offsets = [0, 0], sizes = [8, 64], strides = [1, 1]} : vector<8x192xf32> to vector<8x64xf32>
    %20 = vector.extract_strided_slice %18 {offsets = [0, 64], sizes = [8, 64], strides = [1, 1]} : vector<8x192xf32> to vector<8x64xf32>
    %21 = vector.extract_strided_slice %18 {offsets = [0, 128], sizes = [8, 64], strides = [1, 1]} : vector<8x192xf32> to vector<8x64xf32>
    %22 = vector.extract_strided_slice %13 {offsets = [0, 192], sizes = [8, 64], strides = [1, 1]} : vector<8x256xf32> to vector<8x64xf32>
    %23 = arith.mulf %20, %8 : vector<8x64xf32>
    %24 = arith.mulf %19, %22 : vector<8x64xf32>
    %25 = arith.addf %23, %24 : vector<8x64xf32>
    %26 = math.tanh %25 : vector<8x64xf32>
    %27 = arith.mulf %21, %26 : vector<8x64xf32>
    %c8 = arith.constant 8 : index
    %c0_16 = arith.constant 0 : index
    %28 = vector.load %arg11[%c8, %c0_16] : memref<64x256xf32, #tpu.memory_space<vmem>>, vector<8x256xf32>
    %c0_17 = arith.constant 0 : index
    %c0_18 = arith.constant 0 : index
    %29 = vector.load %arg2[%c0_17, %c0_18] : memref<64x256xf32, #tpu.memory_space<vmem>>, vector<64x256xf32>
    %cst_19 = arith.constant dense<0.000000e+00> : vector<8x256xf32>
    %30 = tpu.matmul %27, %29, %cst_19 {dimension_numbers = #tpu.dot_dimension_numbers<[1], [0], [0], [1], [0, 0, 1, 1], [], []>} : vector<8x64xf32>, vector<64x256xf32>, vector<8x256xf32> -> vector<8x256xf32>
    %31 = arith.addf %28, %30 : vector<8x256xf32>
    %32 = math.tanh %31 : vector<8x256xf32>
    %33 = vector.extract_strided_slice %32 {offsets = [0, 0], sizes = [8, 192], strides = [1, 1]} : vector<8x256xf32> to vector<8x192xf32>
    %cst_20 = arith.constant 5.000000e-01 : f32
    %34 = vector.broadcast %cst_20 : f32 to vector<8x192xf32>
    %35 = arith.mulf %33, %34 : vector<8x192xf32>
    %cst_21 = arith.constant 5.000000e-01 : f32
    %36 = vector.broadcast %cst_21 : f32 to vector<8x192xf32>
    %37 = arith.addf %35, %36 : vector<8x192xf32>
    %38 = vector.extract_strided_slice %37 {offsets = [0, 0], sizes = [8, 64], strides = [1, 1]} : vector<8x192xf32> to vector<8x64xf32>
    %39 = vector.extract_strided_slice %37 {offsets = [0, 64], sizes = [8, 64], strides = [1, 1]} : vector<8x192xf32> to vector<8x64xf32>
    %40 = vector.extract_strided_slice %37 {offsets = [0, 128], sizes = [8, 64], strides = [1, 1]} : vector<8x192xf32> to vector<8x64xf32>
    %41 = vector.extract_strided_slice %32 {offsets = [0, 192], sizes = [8, 64], strides = [1, 1]} : vector<8x256xf32> to vector<8x64xf32>
    %42 = arith.mulf %39, %25 : vector<8x64xf32>
    %43 = arith.mulf %38, %41 : vector<8x64xf32>
    %44 = arith.addf %42, %43 : vector<8x64xf32>
    %45 = math.tanh %44 : vector<8x64xf32>
    %46 = arith.mulf %40, %45 : vector<8x64xf32>
    %c16 = arith.constant 16 : index
    %c0_22 = arith.constant 0 : index
    %47 = vector.load %arg11[%c16, %c0_22] : memref<64x256xf32, #tpu.memory_space<vmem>>, vector<8x256xf32>
    %c0_23 = arith.constant 0 : index
    %c0_24 = arith.constant 0 : index
    %48 = vector.load %arg2[%c0_23, %c0_24] : memref<64x256xf32, #tpu.memory_space<vmem>>, vector<64x256xf32>
    %cst_25 = arith.constant dense<0.000000e+00> : vector<8x256xf32>
    %49 = tpu.matmul %46, %48, %cst_25 {dimension_numbers = #tpu.dot_dimension_numbers<[1], [0], [0], [1], [0, 0, 1, 1], [], []>} : vector<8x64xf32>, vector<64x256xf32>, vector<8x256xf32> -> vector<8x256xf32>
    %50 = arith.addf %47, %49 : vector<8x256xf32>
    %51 = math.tanh %50 : vector<8x256xf32>
    %52 = vector.extract_strided_slice %51 {offsets = [0, 0], sizes = [8, 192], strides = [1, 1]} : vector<8x256xf32> to vector<8x192xf32>
    %cst_26 = arith.constant 5.000000e-01 : f32
    %53 = vector.broadcast %cst_26 : f32 to vector<8x192xf32>
    %54 = arith.mulf %52, %53 : vector<8x192xf32>
    %cst_27 = arith.constant 5.000000e-01 : f32
    %55 = vector.broadcast %cst_27 : f32 to vector<8x192xf32>
    %56 = arith.addf %54, %55 : vector<8x192xf32>
    %57 = vector.extract_strided_slice %56 {offsets = [0, 0], sizes = [8, 64], strides = [1, 1]} : vector<8x192xf32> to vector<8x64xf32>
    %58 = vector.extract_strided_slice %56 {offsets = [0, 64], sizes = [8, 64], strides = [1, 1]} : vector<8x192xf32> to vector<8x64xf32>
    %59 = vector.extract_strided_slice %56 {offsets = [0, 128], sizes = [8, 64], strides = [1, 1]} : vector<8x192xf32> to vector<8x64xf32>
    %60 = vector.extract_strided_slice %51 {offsets = [0, 192], sizes = [8, 64], strides = [1, 1]} : vector<8x256xf32> to vector<8x64xf32>
    %61 = arith.mulf %58, %44 : vector<8x64xf32>
    %62 = arith.mulf %57, %60 : vector<8x64xf32>
    %63 = arith.addf %61, %62 : vector<8x64xf32>
    %64 = math.tanh %63 : vector<8x64xf32>
    %65 = arith.mulf %59, %64 : vector<8x64xf32>
    %c24 = arith.constant 24 : index
    %c0_28 = arith.constant 0 : index
    %66 = vector.load %arg11[%c24, %c0_28] : memref<64x256xf32, #tpu.memory_space<vmem>>, vector<8x256xf32>
    %c0_29 = arith.constant 0 : index
    %c0_30 = arith.constant 0 : index
    %67 = vector.load %arg2[%c0_29, %c0_30] : memref<64x256xf32, #tpu.memory_space<vmem>>, vector<64x256xf32>
    %cst_31 = arith.constant dense<0.000000e+00> : vector<8x256xf32>
    %68 = tpu.matmul %65, %67, %cst_31 {dimension_numbers = #tpu.dot_dimension_numbers<[1], [0], [0], [1], [0, 0, 1, 1], [], []>} : vector<8x64xf32>, vector<64x256xf32>, vector<8x256xf32> -> vector<8x256xf32>
    %69 = arith.addf %66, %68 : vector<8x256xf32>
    %70 = math.tanh %69 : vector<8x256xf32>
    %71 = vector.extract_strided_slice %70 {offsets = [0, 0], sizes = [8, 192], strides = [1, 1]} : vector<8x256xf32> to vector<8x192xf32>
    %cst_32 = arith.constant 5.000000e-01 : f32
    %72 = vector.broadcast %cst_32 : f32 to vector<8x192xf32>
    %73 = arith.mulf %71, %72 : vector<8x192xf32>
    %cst_33 = arith.constant 5.000000e-01 : f32
    %74 = vector.broadcast %cst_33 : f32 to vector<8x192xf32>
    %75 = arith.addf %73, %74 : vector<8x192xf32>
    %76 = vector.extract_strided_slice %75 {offsets = [0, 0], sizes = [8, 64], strides = [1, 1]} : vector<8x192xf32> to vector<8x64xf32>
    %77 = vector.extract_strided_slice %75 {offsets = [0, 64], sizes = [8, 64], strides = [1, 1]} : vector<8x192xf32> to vector<8x64xf32>
    %78 = vector.extract_strided_slice %75 {offsets = [0, 128], sizes = [8, 64], strides = [1, 1]} : vector<8x192xf32> to vector<8x64xf32>
    %79 = vector.extract_strided_slice %70 {offsets = [0, 192], sizes = [8, 64], strides = [1, 1]} : vector<8x256xf32> to vector<8x64xf32>
    %80 = arith.mulf %77, %63 : vector<8x64xf32>
    %81 = arith.mulf %76, %79 : vector<8x64xf32>
    %82 = arith.addf %80, %81 : vector<8x64xf32>
    %83 = math.tanh %82 : vector<8x64xf32>
    %84 = arith.mulf %78, %83 : vector<8x64xf32>
    %c32 = arith.constant 32 : index
    %c0_34 = arith.constant 0 : index
    %85 = vector.load %arg11[%c32, %c0_34] : memref<64x256xf32, #tpu.memory_space<vmem>>, vector<8x256xf32>
    %c0_35 = arith.constant 0 : index
    %c0_36 = arith.constant 0 : index
    %86 = vector.load %arg2[%c0_35, %c0_36] : memref<64x256xf32, #tpu.memory_space<vmem>>, vector<64x256xf32>
    %cst_37 = arith.constant dense<0.000000e+00> : vector<8x256xf32>
    %87 = tpu.matmul %84, %86, %cst_37 {dimension_numbers = #tpu.dot_dimension_numbers<[1], [0], [0], [1], [0, 0, 1, 1], [], []>} : vector<8x64xf32>, vector<64x256xf32>, vector<8x256xf32> -> vector<8x256xf32>
    %88 = arith.addf %85, %87 : vector<8x256xf32>
    %89 = math.tanh %88 : vector<8x256xf32>
    %90 = vector.extract_strided_slice %89 {offsets = [0, 0], sizes = [8, 192], strides = [1, 1]} : vector<8x256xf32> to vector<8x192xf32>
    %cst_38 = arith.constant 5.000000e-01 : f32
    %91 = vector.broadcast %cst_38 : f32 to vector<8x192xf32>
    %92 = arith.mulf %90, %91 : vector<8x192xf32>
    %cst_39 = arith.constant 5.000000e-01 : f32
    %93 = vector.broadcast %cst_39 : f32 to vector<8x192xf32>
    %94 = arith.addf %92, %93 : vector<8x192xf32>
    %95 = vector.extract_strided_slice %94 {offsets = [0, 0], sizes = [8, 64], strides = [1, 1]} : vector<8x192xf32> to vector<8x64xf32>
    %96 = vector.extract_strided_slice %94 {offsets = [0, 64], sizes = [8, 64], strides = [1, 1]} : vector<8x192xf32> to vector<8x64xf32>
    %97 = vector.extract_strided_slice %94 {offsets = [0, 128], sizes = [8, 64], strides = [1, 1]} : vector<8x192xf32> to vector<8x64xf32>
    %98 = vector.extract_strided_slice %89 {offsets = [0, 192], sizes = [8, 64], strides = [1, 1]} : vector<8x256xf32> to vector<8x64xf32>
    %99 = arith.mulf %96, %82 : vector<8x64xf32>
    %100 = arith.mulf %95, %98 : vector<8x64xf32>
    %101 = arith.addf %99, %100 : vector<8x64xf32>
    %102 = math.tanh %101 : vector<8x64xf32>
    %103 = arith.mulf %97, %102 : vector<8x64xf32>
    %c40 = arith.constant 40 : index
    %c0_40 = arith.constant 0 : index
    %104 = vector.load %arg11[%c40, %c0_40] : memref<64x256xf32, #tpu.memory_space<vmem>>, vector<8x256xf32>
    %c0_41 = arith.constant 0 : index
    %c0_42 = arith.constant 0 : index
    %105 = vector.load %arg2[%c0_41, %c0_42] : memref<64x256xf32, #tpu.memory_space<vmem>>, vector<64x256xf32>
    %cst_43 = arith.constant dense<0.000000e+00> : vector<8x256xf32>
    %106 = tpu.matmul %103, %105, %cst_43 {dimension_numbers = #tpu.dot_dimension_numbers<[1], [0], [0], [1], [0, 0, 1, 1], [], []>} : vector<8x64xf32>, vector<64x256xf32>, vector<8x256xf32> -> vector<8x256xf32>
    %107 = arith.addf %104, %106 : vector<8x256xf32>
    %108 = math.tanh %107 : vector<8x256xf32>
    %109 = vector.extract_strided_slice %108 {offsets = [0, 0], sizes = [8, 192], strides = [1, 1]} : vector<8x256xf32> to vector<8x192xf32>
    %cst_44 = arith.constant 5.000000e-01 : f32
    %110 = vector.broadcast %cst_44 : f32 to vector<8x192xf32>
    %111 = arith.mulf %109, %110 : vector<8x192xf32>
    %cst_45 = arith.constant 5.000000e-01 : f32
    %112 = vector.broadcast %cst_45 : f32 to vector<8x192xf32>
    %113 = arith.addf %111, %112 : vector<8x192xf32>
    %114 = vector.extract_strided_slice %113 {offsets = [0, 0], sizes = [8, 64], strides = [1, 1]} : vector<8x192xf32> to vector<8x64xf32>
    %115 = vector.extract_strided_slice %113 {offsets = [0, 64], sizes = [8, 64], strides = [1, 1]} : vector<8x192xf32> to vector<8x64xf32>
    %116 = vector.extract_strided_slice %113 {offsets = [0, 128], sizes = [8, 64], strides = [1, 1]} : vector<8x192xf32> to vector<8x64xf32>
    %117 = vector.extract_strided_slice %108 {offsets = [0, 192], sizes = [8, 64], strides = [1, 1]} : vector<8x256xf32> to vector<8x64xf32>
    %118 = arith.mulf %115, %101 : vector<8x64xf32>
    %119 = arith.mulf %114, %117 : vector<8x64xf32>
    %120 = arith.addf %118, %119 : vector<8x64xf32>
    %121 = math.tanh %120 : vector<8x64xf32>
    %122 = arith.mulf %116, %121 : vector<8x64xf32>
    %c48 = arith.constant 48 : index
    %c0_46 = arith.constant 0 : index
    %123 = vector.load %arg11[%c48, %c0_46] : memref<64x256xf32, #tpu.memory_space<vmem>>, vector<8x256xf32>
    %c0_47 = arith.constant 0 : index
    %c0_48 = arith.constant 0 : index
    %124 = vector.load %arg2[%c0_47, %c0_48] : memref<64x256xf32, #tpu.memory_space<vmem>>, vector<64x256xf32>
    %cst_49 = arith.constant dense<0.000000e+00> : vector<8x256xf32>
    %125 = tpu.matmul %122, %124, %cst_49 {dimension_numbers = #tpu.dot_dimension_numbers<[1], [0], [0], [1], [0, 0, 1, 1], [], []>} : vector<8x64xf32>, vector<64x256xf32>, vector<8x256xf32> -> vector<8x256xf32>
    %126 = arith.addf %123, %125 : vector<8x256xf32>
    %127 = math.tanh %126 : vector<8x256xf32>
    %128 = vector.extract_strided_slice %127 {offsets = [0, 0], sizes = [8, 192], strides = [1, 1]} : vector<8x256xf32> to vector<8x192xf32>
    %cst_50 = arith.constant 5.000000e-01 : f32
    %129 = vector.broadcast %cst_50 : f32 to vector<8x192xf32>
    %130 = arith.mulf %128, %129 : vector<8x192xf32>
    %cst_51 = arith.constant 5.000000e-01 : f32
    %131 = vector.broadcast %cst_51 : f32 to vector<8x192xf32>
    %132 = arith.addf %130, %131 : vector<8x192xf32>
    %133 = vector.extract_strided_slice %132 {offsets = [0, 0], sizes = [8, 64], strides = [1, 1]} : vector<8x192xf32> to vector<8x64xf32>
    %134 = vector.extract_strided_slice %132 {offsets = [0, 64], sizes = [8, 64], strides = [1, 1]} : vector<8x192xf32> to vector<8x64xf32>
    %135 = vector.extract_strided_slice %132 {offsets = [0, 128], sizes = [8, 64], strides = [1, 1]} : vector<8x192xf32> to vector<8x64xf32>
    %136 = vector.extract_strided_slice %127 {offsets = [0, 192], sizes = [8, 64], strides = [1, 1]} : vector<8x256xf32> to vector<8x64xf32>
    %137 = arith.mulf %134, %120 : vector<8x64xf32>
    %138 = arith.mulf %133, %136 : vector<8x64xf32>
    %139 = arith.addf %137, %138 : vector<8x64xf32>
    %140 = math.tanh %139 : vector<8x64xf32>
    %141 = arith.mulf %135, %140 : vector<8x64xf32>
    %c56 = arith.constant 56 : index
    %c0_52 = arith.constant 0 : index
    %142 = vector.load %arg11[%c56, %c0_52] : memref<64x256xf32, #tpu.memory_space<vmem>>, vector<8x256xf32>
    %c0_53 = arith.constant 0 : index
    %c0_54 = arith.constant 0 : index
    %143 = vector.load %arg2[%c0_53, %c0_54] : memref<64x256xf32, #tpu.memory_space<vmem>>, vector<64x256xf32>
    %cst_55 = arith.constant dense<0.000000e+00> : vector<8x256xf32>
    %144 = tpu.matmul %141, %143, %cst_55 {dimension_numbers = #tpu.dot_dimension_numbers<[1], [0], [0], [1], [0, 0, 1, 1], [], []>} : vector<8x64xf32>, vector<64x256xf32>, vector<8x256xf32> -> vector<8x256xf32>
    %145 = arith.addf %142, %144 : vector<8x256xf32>
    %146 = math.tanh %145 : vector<8x256xf32>
    %147 = vector.extract_strided_slice %146 {offsets = [0, 0], sizes = [8, 192], strides = [1, 1]} : vector<8x256xf32> to vector<8x192xf32>
    %cst_56 = arith.constant 5.000000e-01 : f32
    %148 = vector.broadcast %cst_56 : f32 to vector<8x192xf32>
    %149 = arith.mulf %147, %148 : vector<8x192xf32>
    %cst_57 = arith.constant 5.000000e-01 : f32
    %150 = vector.broadcast %cst_57 : f32 to vector<8x192xf32>
    %151 = arith.addf %149, %150 : vector<8x192xf32>
    %152 = vector.extract_strided_slice %151 {offsets = [0, 0], sizes = [8, 64], strides = [1, 1]} : vector<8x192xf32> to vector<8x64xf32>
    %153 = vector.extract_strided_slice %151 {offsets = [0, 64], sizes = [8, 64], strides = [1, 1]} : vector<8x192xf32> to vector<8x64xf32>
    %154 = vector.extract_strided_slice %151 {offsets = [0, 128], sizes = [8, 64], strides = [1, 1]} : vector<8x192xf32> to vector<8x64xf32>
    %155 = vector.extract_strided_slice %146 {offsets = [0, 192], sizes = [8, 64], strides = [1, 1]} : vector<8x256xf32> to vector<8x64xf32>
    %156 = arith.mulf %153, %139 : vector<8x64xf32>
    %157 = arith.mulf %152, %155 : vector<8x64xf32>
    %158 = arith.addf %156, %157 : vector<8x64xf32>
    %159 = math.tanh %158 : vector<8x64xf32>
    %160 = arith.mulf %154, %159 : vector<8x64xf32>
    %c0_58 = arith.constant 0 : index
    %c0_59 = arith.constant 0 : index
    %161 = vector.load %arg4[%c0_58, %c0_59] : memref<64x32xf32, #tpu.memory_space<vmem>>, vector<64x32xf32>
    %cst_60 = arith.constant dense<0.000000e+00> : vector<8x32xf32>
    %162 = tpu.matmul %160, %161, %cst_60 {dimension_numbers = #tpu.dot_dimension_numbers<[1], [0], [0], [1], [0, 0, 1, 1], [], []>} : vector<8x64xf32>, vector<64x32xf32>, vector<8x32xf32> -> vector<8x32xf32>
    %c0_61 = arith.constant 0 : index
    %c0_62 = arith.constant 0 : index
    %163 = vector.load %arg5[%c0_61, %c0_62] : memref<1x32xf32, #tpu.memory_space<vmem>>, vector<1x32xf32>
    %164 = vector.broadcast %163 : vector<1x32xf32> to vector<8x32xf32>
    %165 = arith.addf %162, %164 : vector<8x32xf32>
    %cst_63 = arith.constant 0.000000e+00 : f32
    %166 = vector.broadcast %cst_63 : f32 to vector<8x32xf32>
    %167 = arith.maximumf %165, %166 : vector<8x32xf32>
    %c0_64 = arith.constant 0 : index
    %c0_65 = arith.constant 0 : index
    %168 = vector.load %arg6[%c0_64, %c0_65] : memref<32x32xf32, #tpu.memory_space<vmem>>, vector<32x32xf32>
    %cst_66 = arith.constant dense<0.000000e+00> : vector<8x32xf32>
    %169 = tpu.matmul %167, %168, %cst_66 {dimension_numbers = #tpu.dot_dimension_numbers<[1], [0], [0], [1], [0, 0, 1, 1], [], []>} : vector<8x32xf32>, vector<32x32xf32>, vector<8x32xf32> -> vector<8x32xf32>
    %c0_67 = arith.constant 0 : index
    %c0_68 = arith.constant 0 : index
    %170 = vector.load %arg7[%c0_67, %c0_68] : memref<1x32xf32, #tpu.memory_space<vmem>>, vector<1x32xf32>
    %171 = vector.broadcast %170 : vector<1x32xf32> to vector<8x32xf32>
    %172 = arith.addf %169, %171 : vector<8x32xf32>
    %cst_69 = arith.constant 0.000000e+00 : f32
    %173 = vector.broadcast %cst_69 : f32 to vector<8x32xf32>
    %174 = arith.maximumf %172, %173 : vector<8x32xf32>
    %c0_70 = arith.constant 0 : index
    %c0_71 = arith.constant 0 : index
    %175 = vector.load %arg8[%c0_70, %c0_71] : memref<32x8xf32, #tpu.memory_space<vmem>>, vector<32x8xf32>
    %cst_72 = arith.constant dense<0.000000e+00> : vector<8x8xf32>
    %176 = tpu.matmul %174, %175, %cst_72 {dimension_numbers = #tpu.dot_dimension_numbers<[1], [0], [0], [1], [0, 0, 1, 1], [], []>} : vector<8x32xf32>, vector<32x8xf32>, vector<8x8xf32> -> vector<8x8xf32>
    %c0_73 = arith.constant 0 : index
    %c0_74 = arith.constant 0 : index
    %177 = vector.load %arg9[%c0_73, %c0_74] : memref<1x8xf32, #tpu.memory_space<vmem>>, vector<1x8xf32>
    %178 = vector.broadcast %177 : vector<1x8xf32> to vector<8x8xf32>
    %179 = arith.addf %176, %178 : vector<8x8xf32>
    %c0_75 = arith.constant 0 : index
    %c0_76 = arith.constant 0 : index
    %180 = vector.load %arg10[%c0_75, %c0_76] : memref<8x8xf32, #tpu.memory_space<vmem>>, vector<8x8xf32>
    tpu.vector_store %arg10[%c0_75, %c0_76], %179 {strides = array<i32>} : memref<8x8xf32, #tpu.memory_space<vmem>>, vector<8x8xf32>,
    return
  }
}

</mosaic_0001>

<llo_original>
// kernel: tpu_custom_call.1
$region0: #{tpu_custom_call.1}
  #allocation0 [shape = 'u32[]', space=smem, size = 0x4, offset = 0x4, fixed_abs, tag = 'smem constant byte address 0x4 - core index']
  #allocation1 [shape = 'u32[144,128]{1,0:T(1,128)}', space=vmem, size = 0x12000, scoped, tag = 'internal scratch']
  #allocation2 [shape = 'f32[64,256]{1,0:T(8,128)}', space=vmem, size = 0x10000, scoped, tag = 'scratch operand']
  %s0 = inlined_call_operand.vmem [shape: f32[64,24], index: 0, kind: input, shape index: {}]
  %s1 = inlined_call_operand.vmem [shape: f32[24,256], index: 1, kind: input, shape index: {}]
  %s2 = inlined_call_operand.vmem [shape: f32[64,256], index: 2, kind: input, shape index: {}]
  %s3 = inlined_call_operand.vmem [shape: f32[1,256], index: 3, kind: input, shape index: {}]
  %s4 = inlined_call_operand.vmem [shape: f32[64,32], index: 4, kind: input, shape index: {}]
  %s5 = inlined_call_operand.vmem [shape: f32[1,32], index: 5, kind: input, shape index: {}]
  %s6 = inlined_call_operand.hbm [shape: f32[32,32], index: 6, kind: input, shape index: {}]
  %s7 = inlined_call_operand.vmem [shape: f32[1,32], index: 7, kind: input, shape index: {}]
  %s8 = inlined_call_operand.vmem [shape: f32[32,8], index: 8, kind: input, shape index: {}]
  %s9 = inlined_call_operand.vmem [shape: f32[1,8], index: 9, kind: input, shape index: {}]
  %s10 = inlined_call_operand.hbm [shape: f32[8,8], index: 10, kind: output, shape index: {}]
  %s11 = sld [smem:[#allocation0]]
  $region54: #{tpu_custom_call.1} parent=0
    _
  %s13 = ssub.s32 1, %s11
  %s14 = scalar_select 0, %s13, %s11
  $region1: #{tpu_custom_call.1} parent=0
    #allocation3 [shape = 'u8[16384]{0}', space=vmem, size = 0x4000, scoped, tag = 'input window, operand 6, single buffered']
    #allocation4 [shape = 's32[1]{0}', space=sflag, size = 0x4, scoped, tag = 'scoped memory for tpu_custom_call.1']
    #allocation5 [shape = 's32[1]{0}', space=sflag, size = 0x4, scoped, tag = 'scoped memory for tpu_custom_call.1']
    #allocation6 [shape = 'u8[4096]{0}', space=vmem, size = 0x1000, scoped, tag = 'output window, operand 0, single buffered']
    %15 = vsyncpa [#allocation4], 0
    %16 = vsyncpa [#allocation5], 0
    // Predicated region
    $region2: #{tpu_custom_call.1} parent=1 // pred_check
      _
    $region3: #{tpu_custom_call.1} parent=1 // pred_check_branch
      %18 = sbr.rel (0) target = $region5
    $region4: #{tpu_custom_call.1} parent=1 // pred_region
      _
    $region5: #{tpu_custom_call.1} parent=1 // pred_fallthru
      _
    // Predicated region
    $region6: #{tpu_custom_call.1} parent=1 // pred_check
      _
    $region7: #{tpu_custom_call.1} parent=1 // pred_check_branch
      %20 = sbr.rel (0) target = $region9
    $region8: #{tpu_custom_call.1} parent=1 // pred_region
      _
    $region9: #{tpu_custom_call.1} parent=1 // pred_fallthru
      _
    // Predicated region
    $region10: #{tpu_custom_call.1} parent=1 // pred_check
      _
    $region11: #{tpu_custom_call.1} parent=1 // pred_check_branch
      %22 = sbr.rel (0) target = $region13
    $region12: #{tpu_custom_call.1} parent=1 // pred_region
      _
    $region13: #{tpu_custom_call.1} parent=1 // pred_fallthru
      _
    // Predicated region
    $region14: #{tpu_custom_call.1} parent=1 // pred_check
      _
    $region15: #{tpu_custom_call.1} parent=1 // pred_check_branch
      %24 = sbr.rel (0) target = $region17
    $region16: #{tpu_custom_call.1} parent=1 // pred_region
      _
    $region17: #{tpu_custom_call.1} parent=1 // pred_fallthru
      _
    // Predicated region
    $region18: #{tpu_custom_call.1} parent=1 // pred_check
      _
    $region19: #{tpu_custom_call.1} parent=1 // pred_check_branch
      %26 = sbr.rel (0) target = $region21
    $region20: #{tpu_custom_call.1} parent=1 // pred_region
      _
    $region21: #{tpu_custom_call.1} parent=1 // pred_fallthru
      _
    // Predicated region
    $region22: #{tpu_custom_call.1} parent=1 // pred_check
      _
    $region23: #{tpu_custom_call.1} parent=1 // pred_check_branch
      %28 = sbr.rel (0) target = $region25
    $region24: #{tpu_custom_call.1} parent=1 // pred_region
      _
    $region25: #{tpu_custom_call.1} parent=1 // pred_fallthru
      _
    // Predicated region
    $region26: #{tpu_custom_call.1} parent=1 // pred_check
      _
    $region27: #{tpu_custom_call.1} parent=1 // pred_check_branch
      %30 = sbr.rel (0) target = $region29
    $region28: #{tpu_custom_call.1} parent=1 // pred_region
      %s32 = ssub.s32 512, 512
      %33 = vsyncadd [#allocation4], %s32
      %s34 = sshll.u32 [#allocation3], 4
      %s35 = int_to_ptr.vmem [resolvable:$true] %s34
      %40 = dma.hbm_to_vmem [thread:$0]  %s6, 512, %s35, [#allocation4], 128, 128, 8
    $region29: #{tpu_custom_call.1} parent=1 // pred_fallthru
      _
    // Predicated region
    $region30: #{tpu_custom_call.1} parent=1 // pred_check
      _
    $region31: #{tpu_custom_call.1} parent=1 // pred_check_branch
      %42 = sbr.rel (0) target = $region33
    $region32: #{tpu_custom_call.1} parent=1 // pred_region
      _
    $region33: #{tpu_custom_call.1} parent=1 // pred_fallthru
      _
    // Predicated region
    $region34: #{tpu_custom_call.1} parent=1 // pred_check
      _
    $region35: #{tpu_custom_call.1} parent=1 // pred_check_branch
      %44 = sbr.rel (0) target = $region37
    $region36: #{tpu_custom_call.1} parent=1 // pred_region
      _
    $region37: #{tpu_custom_call.1} parent=1 // pred_fallthru
      _
    // Predicated region
    $region38: #{tpu_custom_call.1} parent=1 // pred_check
      _
    $region39: #{tpu_custom_call.1} parent=1 // pred_check_branch
      %46 = sbr.rel (0) target = $region41
    $region40: #{tpu_custom_call.1} parent=1 // pred_region
      _
    $region41: #{tpu_custom_call.1} parent=1 // pred_fallthru
      _
    // Predicated region
    $region42: #{tpu_custom_call.1} parent=1 // pred_check
      _
    $region43: #{tpu_custom_call.1} parent=1 // pred_check_branch
      %48 = sbr.rel (0) target = $region45
    $region44: #{tpu_custom_call.1} parent=1 // pred_region
      %49 = dma.done [#allocation4], 512
    $region45: #{tpu_custom_call.1} parent=1 // pred_fallthru
      _
    %v50 = vld [vmem:[%s0] sm:$0xff]
    %v51 = vld [vmem:[%s0 + $0x8] sm:$0xff]
    %v52 = vld [vmem:[%s0 + $0x10] sm:$0xff]
    %v53 = vld [vmem:[%s0 + $0x18] sm:$0xff]
    %v54 = vld [vmem:[%s0 + $0x20] sm:$0xff]
    %v55 = vld [vmem:[%s0 + $0x28] sm:$0xff]
    %v56 = vld [vmem:[%s0 + $0x30] sm:$0xff]
    %v57 = vld [vmem:[%s0 + $0x38] sm:$0xff]
    %v58 = vld [vmem:[%s1] sm:$0xff]
    %v59 = vld [vmem:[%s1 + $0x8] sm:$0xff]
    %v60 = vld [vmem:[%s1 + $0x10] sm:$0xff]
    %v61 = vld [vmem:[%s1 + $0x18] sm:$0xff]
    %v62 = vld [vmem:[%s1 + $0x20] sm:$0xff]
    %v63 = vld [vmem:[%s1 + $0x28] sm:$0xff]
    %v64 = vld [vmem:[%s3] sm:$0x3]
    %v66 = vlaneseq
    %v67 = vshrl.u32 %v66, 7
    %v68 = vsub.s32 0, %v67
    %v69 = vrot.slane %v64, %v68
    %v70 = vlaneseq
    %v71 = vshrl.u32 %v70, 7
    %v72 = vsub.s32 1, %v71
    %v73 = vrot.slane %v64, %v72
    %vm76 = vcmask 195584
    %v78 = vsel %vm76, %v50, 0
    %v81 = vsel %vm76, %v51, 0
    %v84 = vsel %vm76, %v52, 0
    %v87 = vsel %vm76, %v53, 0
    %v90 = vsel %vm76, %v54, 0
    %v93 = vsel %vm76, %v55, 0
    %v96 = vsel %vm76, %v56, 0
    %v99 = vsel %vm76, %v57, 0
    %101 = vmatprep.subr.mxu0 0.0
    %102 = vmatpush1.msra.mxu0 0.0
    %103 = vmatprep.subr.mxu0 0.0
    %104 = vmatpush1.msra.mxu0 0.0
    %105 = vmatprep.subr.mxu0 0.0
    %106 = vmatpush1.msra.mxu0 0.0
    %107 = vmatprep.subr.mxu0 0.0
    %108 = vmatpush1.msra.mxu0 0.0
    %109 = vmatprep.subr.mxu0 0.0
    %110 = vmatpush1.msra.mxu0 0.0
    %111 = vmatprep.subr.mxu0 0.0
    %112 = vmatpush1.msra.mxu0 0.0
    %113 = vmatprep.subr.mxu0 0.0
    %114 = vmatpush1.msra.mxu0 0.0
    %115 = vmatprep.subr.mxu0 0.0
    %116 = vmatpush1.msra.mxu0 0.0
    %117 = vmatprep.subr.mxu0 0.0
    %118 = vmatpush1.msra.mxu0 0.0
    %119 = vmatprep.subr.mxu0 0.0
    %120 = vmatpush1.msra.mxu0 0.0
    %121 = vmatprep.subr.mxu0 0.0
    %122 = vmatpush1.msra.mxu0 0.0
    %123 = vmatprep.subr.mxu0 0.0
    %124 = vmatpush1.msra.mxu0 0.0
    %125 = vmatprep.subr.mxu0 0.0
    %126 = vmatpush1.msra.mxu0 0.0
    %127 = vmatprep.subr.mxu0 %v63
    %128 = vmatpush1.msra.mxu0 %v62
    %129 = vmatprep.subr.mxu0 %v61
    %130 = vmatpush1.msra.mxu0 %v60
    %131 = vmatprep.subr.mxu0 %v59
    %132 = vmatpush1.msra.mxu0 %v58
    %133 = vmatprep.subr.mxu0 0.0
    %134 = vmatpush2.msra.mxu0 0.0
    %135 = vmatprep.subr.mxu0 0.0
    %136 = vmatpush2.msra.mxu0 0.0
    %137 = vmatprep.subr.mxu0 0.0
    %138 = vmatpush2.msra.mxu0 0.0
    %139 = vmatprep.subr.mxu0 0.0
    %140 = vmatpush2.msra.mxu0 0.0
    %141 = vmatprep.subr.mxu0 0.0
    %142 = vmatpush2.msra.mxu0 0.0
    %143 = vmatprep.subr.mxu0 0.0
    %144 = vmatpush2.msra.mxu0 0.0
    %145 = vmatprep.subr.mxu0 0.0
    %146 = vmatpush2.msra.mxu0 0.0
    %147 = vmatprep.subr.mxu0 0.0
    %148 = vmatpush2.msra.mxu0 0.0
    %149 = vmatprep.subr.mxu0 0.0
    %150 = vmatpush2.msra.mxu0 0.0
    %151 = vmatprep.subr.mxu0 0.0
    %152 = vmatpush2.msra.mxu0 0.0
    %153 = vmatprep.subr.mxu0 0.0
    %154 = vmatpush2.msra.mxu0 0.0
    %155 = vmatprep.subr.mxu0 0.0
    %156 = vmatpush2.msra.mxu0 0.0
    %157 = vmatprep.subr.mxu0 0.0
    %158 = vmatpush2.msra.mxu0 0.0
    %159 = vmatprep.subr.mxu0 0.0
    %160 = vmatpush2.msra.mxu0 0.0
    %161 = vmatprep.subr.mxu0 0.0
    %162 = vmatpush2.msra.mxu0 0.0
    %163 = vmatprep.subr.mxu0 0.0
    %164 = vmatpush2.msra.mxu0 0.0
    %165 = vmatprep.mubr.f32.mxu0 0.0
    %166 = vmatmul.mubr.f32.gmra.mxu0 %v78
    %v167 = vpop.f32.mrf.mxu0
    %v168 = vadd.f32 %v69, %v167
    %v169 = vpop.f32.mrf.mxu0
    %v170 = vadd.f32 %v73, %v169
    %171 = vmatprep.mubr.f32.mxu0 0.0
    %172 = vmatmul.mubr.f32.gmra.mxu0 %v81
    %v173 = vpop.f32.mrf.mxu0
    %v174 = vadd.f32 %v69, %v173
    %v175 = vpop.f32.mrf.mxu0
    %v176 = vadd.f32 %v73, %v175
    %177 = vmatprep.mubr.f32.mxu0 0.0
    %178 = vmatmul.mubr.f32.gmra.mxu0 %v84
    %v179 = vpop.f32.mrf.mxu0
    %v180 = vadd.f32 %v69, %v179
    %v181 = vpop.f32.mrf.mxu0
    %v182 = vadd.f32 %v73, %v181
    %183 = vmatprep.mubr.f32.mxu0 0.0
    %184 = vmatmul.mubr.f32.gmra.mxu0 %v87
    %v185 = vpop.f32.mrf.mxu0
    %v186 = vadd.f32 %v69, %v185
    %v187 = vpop.f32.mrf.mxu0
    %v188 = vadd.f32 %v73, %v187
    %189 = vmatprep.mubr.f32.mxu0 0.0
    %190 = vmatmul.mubr.f32.gmra.mxu0 %v90
    %v191 = vpop.f32.mrf.mxu0
    %v192 = vadd.f32 %v69, %v191
    %v193 = vpop.f32.mrf.mxu0
    %v194 = vadd.f32 %v73, %v193
    %195 = vmatprep.mubr.f32.mxu0 0.0
    %196 = vmatmul.mubr.f32.gmra.mxu0 %v93
    %v197 = vpop.f32.mrf.mxu0
    %v198 = vadd.f32 %v69, %v197
    %v199 = vpop.f32.mrf.mxu0
    %v200 = vadd.f32 %v73, %v199
    %201 = vmatprep.mubr.f32.mxu0 0.0
    %202 = vmatmul.mubr.f32.gmra.mxu0 %v96
    %v203 = vpop.f32.mrf.mxu0
    %v204 = vadd.f32 %v69, %v203
    %v205 = vpop.f32.mrf.mxu0
    %v206 = vadd.f32 %v73, %v205
    %207 = vmatprep.mubr.f32.mxu0 0.0
    %208 = vmatmul.mubr.f32.gmra.mxu0 %v99
    %v209 = vpop.f32.mrf.mxu0
    %v210 = vadd.f32 %v69, %v209
    %v211 = vpop.f32.mrf.mxu0
    %v212 = vadd.f32 %v73, %v211
    %213 = vdwg.mxu0
    %214 = vst [vmem:[#allocation2] sm:$0xff] %v168
    %215 = vst [vmem:[#allocation2 + $0x8] sm:$0xff] %v170
    %216 = vst [vmem:[#allocation2 + $0x10] sm:$0xff] %v174
    %217 = vst [vmem:[#allocation2 + $0x18] sm:$0xff] %v176
    %218 = vst [vmem:[#allocation2 + $0x20] sm:$0xff] %v180
    %219 = vst [vmem:[#allocation2 + $0x28] sm:$0xff] %v182
    %220 = vst [vmem:[#allocation2 + $0x30] sm:$0xff] %v186
    %221 = vst [vmem:[#allocation2 + $0x38] sm:$0xff] %v188
    %222 = vst [vmem:[#allocation2 + $0x40] sm:$0xff] %v192
    %223 = vst [vmem:[#allocation2 + $0x48] sm:$0xff] %v194
    %224 = vst [vmem:[#allocation2 + $0x50] sm:$0xff] %v198
    %225 = vst [vmem:[#allocation2 + $0x58] sm:$0xff] %v200
    %226 = vst [vmem:[#allocation2 + $0x60] sm:$0xff] %v204
    %227 = vst [vmem:[#allocation2 + $0x68] sm:$0xff] %v206
    %228 = vst [vmem:[#allocation2 + $0x70] sm:$0xff] %v210
    %229 = vst [vmem:[#allocation2 + $0x78] sm:$0xff] %v212
    %v230 = vld [vmem:[#allocation2] sm:$0xff]
    %v231 = vld [vmem:[#allocation2 + $0x8] sm:$0xff]
    %v232 = vld [vmem:[%s2] sm:$0xff]
    %v233 = vld [vmem:[%s2 + $0x8] sm:$0xff]
    %v234 = vld [vmem:[%s2 + $0x10] sm:$0xff]
    %v235 = vld [vmem:[%s2 + $0x18] sm:$0xff]
    %v236 = vld [vmem:[%s2 + $0x20] sm:$0xff]
    %v237 = vld [vmem:[%s2 + $0x28] sm:$0xff]
    %v238 = vld [vmem:[%s2 + $0x30] sm:$0xff]
    %v239 = vld [vmem:[%s2 + $0x38] sm:$0xff]
    %v240 = vld [vmem:[%s2 + $0x40] sm:$0xff]
    %v241 = vld [vmem:[%s2 + $0x48] sm:$0xff]
    %v242 = vld [vmem:[%s2 + $0x50] sm:$0xff]
    %v243 = vld [vmem:[%s2 + $0x58] sm:$0xff]
    %v244 = vld [vmem:[%s2 + $0x60] sm:$0xff]
    %v245 = vld [vmem:[%s2 + $0x68] sm:$0xff]
    %v246 = vld [vmem:[%s2 + $0x70] sm:$0xff]
    %v247 = vld [vmem:[%s2 + $0x78] sm:$0xff]
    %vm248 = vcmask 523264
    %v250 = vsel %vm248, 0.0, 0
    %252 = vmatprep.subr.mxu0 0.0
    %253 = vmatpush1.msra.mxu0 0.0
    %254 = vmatprep.subr.mxu0 0.0
    %255 = vmatpush1.msra.mxu0 0.0
    %256 = vmatprep.subr.mxu0 0.0
    %257 = vmatpush1.msra.mxu0 0.0
    %258 = vmatprep.subr.mxu0 0.0
    %259 = vmatpush1.msra.mxu0 0.0
    %260 = vmatprep.subr.mxu0 0.0
    %261 = vmatpush1.msra.mxu0 0.0
    %262 = vmatprep.subr.mxu0 0.0
    %263 = vmatpush1.msra.mxu0 0.0
    %264 = vmatprep.subr.mxu0 0.0
    %265 = vmatpush1.msra.mxu0 0.0
    %266 = vmatprep.subr.mxu0 0.0
    %267 = vmatpush1.msra.mxu0 0.0
    %268 = vmatprep.subr.mxu0 %v247
    %269 = vmatpush1.msra.mxu0 %v246
    %270 = vmatprep.subr.mxu0 %v245
    %271 = vmatpush1.msra.mxu0 %v244
    %272 = vmatprep.subr.mxu0 %v243
    %273 = vmatpush1.msra.mxu0 %v242
    %274 = vmatprep.subr.mxu0 %v241
    %275 = vmatpush1.msra.mxu0 %v240
    %276 = vmatprep.subr.mxu0 %v239
    %277 = vmatpush1.msra.mxu0 %v238
    %278 = vmatprep.subr.mxu0 %v237
    %279 = vmatpush1.msra.mxu0 %v236
    %280 = vmatprep.subr.mxu0 %v235
    %281 = vmatpush1.msra.mxu0 %v234
    %282 = vmatprep.subr.mxu0 %v233
    %283 = vmatpush1.msra.mxu0 %v232
    %284 = vmatprep.subr.mxu0 0.0
    %285 = vmatpush2.msra.mxu0 0.0
    %286 = vmatprep.subr.mxu0 0.0
    %287 = vmatpush2.msra.mxu0 0.0
    %288 = vmatprep.subr.mxu0 0.0
    %289 = vmatpush2.msra.mxu0 0.0
    %290 = vmatprep.subr.mxu0 0.0
    %291 = vmatpush2.msra.mxu0 0.0
    %292 = vmatprep.subr.mxu0 0.0
    %293 = vmatpush2.msra.mxu0 0.0
    %294 = vmatprep.subr.mxu0 0.0
    %295 = vmatpush2.msra.mxu0 0.0
    %296 = vmatprep.subr.mxu0 0.0
    %297 = vmatpush2.msra.mxu0 0.0
    %298 = vmatprep.subr.mxu0 0.0
    %299 = vmatpush2.msra.mxu0 0.0
    %300 = vmatprep.subr.mxu0 0.0
    %301 = vmatpush2.msra.mxu0 0.0
    %302 = vmatprep.subr.mxu0 0.0
    %303 = vmatpush2.msra.mxu0 0.0
    %304 = vmatprep.subr.mxu0 0.0
    %305 = vmatpush2.msra.mxu0 0.0
    %306 = vmatprep.subr.mxu0 0.0
    %307 = vmatpush2.msra.mxu0 0.0
    %308 = vmatprep.subr.mxu0 0.0
    %309 = vmatpush2.msra.mxu0 0.0
    %310 = vmatprep.subr.mxu0 0.0
    %311 = vmatpush2.msra.mxu0 0.0
    %312 = vmatprep.subr.mxu0 0.0
    %313 = vmatpush2.msra.mxu0 0.0
    %314 = vmatprep.subr.mxu0 0.0
    %315 = vmatpush2.msra.mxu0 0.0
    %316 = vmatprep.mubr.f32.mxu0 0.0
    %317 = vmatmul.mubr.f32.gmra.mxu0 %v250
    %v318 = vpop.f32.mrf.mxu0
    %v319 = vadd.f32 0.0, %v318
    %v320 = vpop.f32.mrf.mxu0
    %v321 = vadd.f32 0.0, %v320
    %322 = vdwg.mxu0
    %v323 = vadd.f32 %v230, %v319
    %v324 = vadd.f32 %v231, %v321
    %v325 = vtanh.pop %v323
    %v326 = vtanh.pop %v324
    %v327 = vmul.f32 %v325, 0.5
    %v328 = vmul.f32 %v326, 0.5
    %v329 = vadd.f32 %v327, 0.5
    %v330 = vadd.f32 %v328, 0.5
    %v331 = vmul.f32 %v329, 0.0
    %333 = vrot.lane.b32.xlu0 %v326, 64
    %v334 = vpop.permute.xlu0 %333
    %v336 = vmul.f32 %v329, %v334
    %338 = vrot.lane.b32.xlu0 %v336, 64
    %v339 = vpop.permute.xlu0 %338
    %v341 = vadd.f32 %v331, %v339
    %v342 = vtanh.pop %v341
    %344 = vrot.lane.b32.xlu0 %v342, 64
    %v345 = vpop.permute.xlu0 %344
    %v347 = vmul.f32 %v330, %v345
    %v348 = vld [vmem:[#allocation2 + $0x10] sm:$0xff]
    %v349 = vld [vmem:[#allocation2 + $0x18] sm:$0xff]
    %v351 = vsel %vm248, %v347, 0
    %353 = vmatprep.subr.mxu0 0.0
    %354 = vmatpush1.msra.mxu0 0.0
    %355 = vmatprep.subr.mxu0 0.0
    %356 = vmatpush1.msra.mxu0 0.0
    %357 = vmatprep.subr.mxu0 0.0
    %358 = vmatpush1.msra.mxu0 0.0
    %359 = vmatprep.subr.mxu0 0.0
    %360 = vmatpush1.msra.mxu0 0.0
    %361 = vmatprep.subr.mxu0 0.0
    %362 = vmatpush1.msra.mxu0 0.0
    %363 = vmatprep.subr.mxu0 0.0
    %364 = vmatpush1.msra.mxu0 0.0
    %365 = vmatprep.subr.mxu0 0.0
    %366 = vmatpush1.msra.mxu0 0.0
    %367 = vmatprep.subr.mxu0 0.0
    %368 = vmatpush1.msra.mxu0 0.0
    %369 = vmatprep.subr.mxu0 %v247
    %370 = vmatpush1.msra.mxu0 %v246
    %371 = vmatprep.subr.mxu0 %v245
    %372 = vmatpush1.msra.mxu0 %v244
    %373 = vmatprep.subr.mxu0 %v243
    %374 = vmatpush1.msra.mxu0 %v242
    %375 = vmatprep.subr.mxu0 %v241
    %376 = vmatpush1.msra.mxu0 %v240
    %377 = vmatprep.subr.mxu0 %v239
    %378 = vmatpush1.msra.mxu0 %v238
    %379 = vmatprep.subr.mxu0 %v237
    %380 = vmatpush1.msra.mxu0 %v236
    %381 = vmatprep.subr.mxu0 %v235
    %382 = vmatpush1.msra.mxu0 %v234
    %383 = vmatprep.subr.mxu0 %v233
    %384 = vmatpush1.msra.mxu0 %v232
    %385 = vmatprep.subr.mxu0 0.0
    %386 = vmatpush2.msra.mxu0 0.0
    %387 = vmatprep.subr.mxu0 0.0
    %388 = vmatpush2.msra.mxu0 0.0
    %389 = vmatprep.subr.mxu0 0.0
    %390 = vmatpush2.msra.mxu0 0.0
    %391 = vmatprep.subr.mxu0 0.0
    %392 = vmatpush2.msra.mxu0 0.0
    %393 = vmatprep.subr.mxu0 0.0
    %394 = vmatpush2.msra.mxu0 0.0
    %395 = vmatprep.subr.mxu0 0.0
    %396 = vmatpush2.msra.mxu0 0.0
    %397 = vmatprep.subr.mxu0 0.0
    %398 = vmatpush2.msra.mxu0 0.0
    %399 = vmatprep.subr.mxu0 0.0
    %400 = vmatpush2.msra.mxu0 0.0
    %401 = vmatprep.subr.mxu0 0.0
    %402 = vmatpush2.msra.mxu0 0.0
    %403 = vmatprep.subr.mxu0 0.0
    %404 = vmatpush2.msra.mxu0 0.0
    %405 = vmatprep.subr.mxu0 0.0
    %406 = vmatpush2.msra.mxu0 0.0
    %407 = vmatprep.subr.mxu0 0.0
    %408 = vmatpush2.msra.mxu0 0.0
    %409 = vmatprep.subr.mxu0 0.0
    %410 = vmatpush2.msra.mxu0 0.0
    %411 = vmatprep.subr.mxu0 0.0
    %412 = vmatpush2.msra.mxu0 0.0
    %413 = vmatprep.subr.mxu0 0.0
    %414 = vmatpush2.msra.mxu0 0.0
    %415 = vmatprep.subr.mxu0 0.0
    %416 = vmatpush2.msra.mxu0 0.0
    %417 = vmatprep.mubr.f32.mxu0 0.0
    %418 = vmatmul.mubr.f32.gmra.mxu0 %v351
    %v419 = vpop.f32.mrf.mxu0
    %v420 = vadd.f32 0.0, %v419
    %v421 = vpop.f32.mrf.mxu0
    %v422 = vadd.f32 0.0, %v421
    %423 = vdwg.mxu0
    %v424 = vadd.f32 %v348, %v420
    %v425 = vadd.f32 %v349, %v422
    %v426 = vtanh.pop %v424
    %v427 = vtanh.pop %v425
    %v428 = vmul.f32 %v426, 0.5
    %v429 = vmul.f32 %v427, 0.5
    %v430 = vadd.f32 %v428, 0.5
    %v431 = vadd.f32 %v429, 0.5
    %v432 = vmul.f32 %v430, %v341
    %434 = vrot.lane.b32.xlu0 %v427, 64
    %v435 = vpop.permute.xlu0 %434
    %v437 = vmul.f32 %v430, %v435
    %439 = vrot.lane.b32.xlu0 %v437, 64
    %v440 = vpop.permute.xlu0 %439
    %v442 = vadd.f32 %v432, %v440
    %v443 = vtanh.pop %v442
    %445 = vrot.lane.b32.xlu0 %v443, 64
    %v446 = vpop.permute.xlu0 %445
    %v448 = vmul.f32 %v431, %v446
    %v449 = vld [vmem:[#allocation2 + $0x20] sm:$0xff]
    %v450 = vld [vmem:[#allocation2 + $0x28] sm:$0xff]
    %v452 = vsel %vm248, %v448, 0
    %454 = vmatprep.subr.mxu0 0.0
    %455 = vmatpush1.msra.mxu0 0.0
    %456 = vmatprep.subr.mxu0 0.0
    %457 = vmatpush1.msra.mxu0 0.0
    %458 = vmatprep.subr.mxu0 0.0
    %459 = vmatpush1.msra.mxu0 0.0
    %460 = vmatprep.subr.mxu0 0.0
    %461 = vmatpush1.msra.mxu0 0.0
    %462 = vmatprep.subr.mxu0 0.0
    %463 = vmatpush1.msra.mxu0 0.0
    %464 = vmatprep.subr.mxu0 0.0
    %465 = vmatpush1.msra.mxu0 0.0
    %466 = vmatprep.subr.mxu0 0.0
    %467 = vmatpush1.msra.mxu0 0.0
    %468 = vmatprep.subr.mxu0 0.0
    %469 = vmatpush1.msra.mxu0 0.0
    %470 = vmatprep.subr.mxu0 %v247
    %471 = vmatpush1.msra.mxu0 %v246
    %472 = vmatprep.subr.mxu0 %v245
    %473 = vmatpush1.msra.mxu0 %v244
    %474 = vmatprep.subr.mxu0 %v243
    %475 = vmatpush1.msra.mxu0 %v242
    %476 = vmatprep.subr.mxu0 %v241
    %477 = vmatpush1.msra.mxu0 %v240
    %478 = vmatprep.subr.mxu0 %v239
    %479 = vmatpush1.msra.mxu0 %v238
    %480 = vmatprep.subr.mxu0 %v237
    %481 = vmatpush1.msra.mxu0 %v236
    %482 = vmatprep.subr.mxu0 %v235
    %483 = vmatpush1.msra.mxu0 %v234
    %484 = vmatprep.subr.mxu0 %v233
    %485 = vmatpush1.msra.mxu0 %v232
    %486 = vmatprep.subr.mxu0 0.0
    %487 = vmatpush2.msra.mxu0 0.0
    %488 = vmatprep.subr.mxu0 0.0
    %489 = vmatpush2.msra.mxu0 0.0
    %490 = vmatprep.subr.mxu0 0.0
    %491 = vmatpush2.msra.mxu0 0.0
    %492 = vmatprep.subr.mxu0 0.0
    %493 = vmatpush2.msra.mxu0 0.0
    %494 = vmatprep.subr.mxu0 0.0
    %495 = vmatpush2.msra.mxu0 0.0
    %496 = vmatprep.subr.mxu0 0.0
    %497 = vmatpush2.msra.mxu0 0.0
    %498 = vmatprep.subr.mxu0 0.0
    %499 = vmatpush2.msra.mxu0 0.0
    %500 = vmatprep.subr.mxu0 0.0
    %501 = vmatpush2.msra.mxu0 0.0
    %502 = vmatprep.subr.mxu0 0.0
    %503 = vmatpush2.msra.mxu0 0.0
    %504 = vmatprep.subr.mxu0 0.0
    %505 = vmatpush2.msra.mxu0 0.0
    %506 = vmatprep.subr.mxu0 0.0
    %507 = vmatpush2.msra.mxu0 0.0
    %508 = vmatprep.subr.mxu0 0.0
    %509 = vmatpush2.msra.mxu0 0.0
    %510 = vmatprep.subr.mxu0 0.0
    %511 = vmatpush2.msra.mxu0 0.0
    %512 = vmatprep.subr.mxu0 0.0
    %513 = vmatpush2.msra.mxu0 0.0
    %514 = vmatprep.subr.mxu0 0.0
    %515 = vmatpush2.msra.mxu0 0.0
    %516 = vmatprep.subr.mxu0 0.0
    %517 = vmatpush2.msra.mxu0 0.0
    %518 = vmatprep.mubr.f32.mxu0 0.0
    %519 = vmatmul.mubr.f32.gmra.mxu0 %v452
    %v520 = vpop.f32.mrf.mxu0
    %v521 = vadd.f32 0.0, %v520
    %v522 = vpop.f32.mrf.mxu0
    %v523 = vadd.f32 0.0, %v522
    %524 = vdwg.mxu0
    %v525 = vadd.f32 %v449, %v521
    %v526 = vadd.f32 %v450, %v523
    %v527 = vtanh.pop %v525
    %v528 = vtanh.pop %v526
    %v529 = vmul.f32 %v527, 0.5
    %v530 = vmul.f32 %v528, 0.5
    %v531 = vadd.f32 %v529, 0.5
    %v532 = vadd.f32 %v530, 0.5
    %v533 = vmul.f32 %v531, %v442
    %535 = vrot.lane.b32.xlu0 %v528, 64
    %v536 = vpop.permute.xlu0 %535
    %v538 = vmul.f32 %v531, %v536
    %540 = vrot.lane.b32.xlu0 %v538, 64
    %v541 = vpop.permute.xlu0 %540
    %v543 = vadd.f32 %v533, %v541
    %v544 = vtanh.pop %v543
    %546 = vrot.lane.b32.xlu0 %v544, 64
    %v547 = vpop.permute.xlu0 %546
    %v549 = vmul.f32 %v532, %v547
    %v550 = vld [vmem:[#allocation2 + $0x30] sm:$0xff]
    %v551 = vld [vmem:[#allocation2 + $0x38] sm:$0xff]
    %v553 = vsel %vm248, %v549, 0
    %555 = vmatprep.subr.mxu0 0.0
    %556 = vmatpush1.msra.mxu0 0.0
    %557 = vmatprep.subr.mxu0 0.0
    %558 = vmatpush1.msra.mxu0 0.0
    %559 = vmatprep.subr.mxu0 0.0
    %560 = vmatpush1.msra.mxu0 0.0
    %561 = vmatprep.subr.mxu0 0.0
    %562 = vmatpush1.msra.mxu0 0.0
    %563 = vmatprep.subr.mxu0 0.0
    %564 = vmatpush1.msra.mxu0 0.0
    %565 = vmatprep.subr.mxu0 0.0
    %566 = vmatpush1.msra.mxu0 0.0
    %567 = vmatprep.subr.mxu0 0.0
    %568 = vmatpush1.msra.mxu0 0.0
    %569 = vmatprep.subr.mxu0 0.0
    %570 = vmatpush1.msra.mxu0 0.0
    %571 = vmatprep.subr.mxu0 %v247
    %572 = vmatpush1.msra.mxu0 %v246
    %573 = vmatprep.subr.mxu0 %v245
    %574 = vmatpush1.msra.mxu0 %v244
    %575 = vmatprep.subr.mxu0 %v243
    %576 = vmatpush1.msra.mxu0 %v242
    %577 = vmatprep.subr.mxu0 %v241
    %578 = vmatpush1.msra.mxu0 %v240
    %579 = vmatprep.subr.mxu0 %v239
    %580 = vmatpush1.msra.mxu0 %v238
    %581 = vmatprep.subr.mxu0 %v237
    %582 = vmatpush1.msra.mxu0 %v236
    %583 = vmatprep.subr.mxu0 %v235
    %584 = vmatpush1.msra.mxu0 %v234
    %585 = vmatprep.subr.mxu0 %v233
    %586 = vmatpush1.msra.mxu0 %v232
    %587 = vmatprep.subr.mxu0 0.0
    %588 = vmatpush2.msra.mxu0 0.0
    %589 = vmatprep.subr.mxu0 0.0
    %590 = vmatpush2.msra.mxu0 0.0
    %591 = vmatprep.subr.mxu0 0.0
    %592 = vmatpush2.msra.mxu0 0.0
    %593 = vmatprep.subr.mxu0 0.0
    %594 = vmatpush2.msra.mxu0 0.0
    %595 = vmatprep.subr.mxu0 0.0
    %596 = vmatpush2.msra.mxu0 0.0
    %597 = vmatprep.subr.mxu0 0.0
    %598 = vmatpush2.msra.mxu0 0.0
    %599 = vmatprep.subr.mxu0 0.0
    %600 = vmatpush2.msra.mxu0 0.0
    %601 = vmatprep.subr.mxu0 0.0
    %602 = vmatpush2.msra.mxu0 0.0
    %603 = vmatprep.subr.mxu0 0.0
    %604 = vmatpush2.msra.mxu0 0.0
    %605 = vmatprep.subr.mxu0 0.0
    %606 = vmatpush2.msra.mxu0 0.0
    %607 = vmatprep.subr.mxu0 0.0
    %608 = vmatpush2.msra.mxu0 0.0
    %609 = vmatprep.subr.mxu0 0.0
    %610 = vmatpush2.msra.mxu0 0.0
    %611 = vmatprep.subr.mxu0 0.0
    %612 = vmatpush2.msra.mxu0 0.0
    %613 = vmatprep.subr.mxu0 0.0
    %614 = vmatpush2.msra.mxu0 0.0
    %615 = vmatprep.subr.mxu0 0.0
    %616 = vmatpush2.msra.mxu0 0.0
    %617 = vmatprep.subr.mxu0 0.0
    %618 = vmatpush2.msra.mxu0 0.0
    %619 = vmatprep.mubr.f32.mxu0 0.0
    %620 = vmatmul.mubr.f32.gmra.mxu0 %v553
    %v621 = vpop.f32.mrf.mxu0
    %v622 = vadd.f32 0.0, %v621
    %v623 = vpop.f32.mrf.mxu0
    %v624 = vadd.f32 0.0, %v623
    %625 = vdwg.mxu0
    %v626 = vadd.f32 %v550, %v622
    %v627 = vadd.f32 %v551, %v624
    %v628 = vtanh.pop %v626
    %v629 = vtanh.pop %v627
    %v630 = vmul.f32 %v628, 0.5
    %v631 = vmul.f32 %v629, 0.5
    %v632 = vadd.f32 %v630, 0.5
    %v633 = vadd.f32 %v631, 0.5
    %v634 = vmul.f32 %v632, %v543
    %636 = vrot.lane.b32.xlu0 %v629, 64
    %v637 = vpop.permute.xlu0 %636
    %v639 = vmul.f32 %v632, %v637
    %641 = vrot.lane.b32.xlu0 %v639, 64
    %v642 = vpop.permute.xlu0 %641
    %v644 = vadd.f32 %v634, %v642
    %v645 = vtanh.pop %v644
    %647 = vrot.lane.b32.xlu0 %v645, 64
    %v648 = vpop.permute.xlu0 %647
    %v650 = vmul.f32 %v633, %v648
    %v651 = vld [vmem:[#allocation2 + $0x40] sm:$0xff]
    %v652 = vld [vmem:[#allocation2 + $0x48] sm:$0xff]
    %v654 = vsel %vm248, %v650, 0
    %656 = vmatprep.subr.mxu0 0.0
    %657 = vmatpush1.msra.mxu0 0.0
    %658 = vmatprep.subr.mxu0 0.0
    %659 = vmatpush1.msra.mxu0 0.0
    %660 = vmatprep.subr.mxu0 0.0
    %661 = vmatpush1.msra.mxu0 0.0
    %662 = vmatprep.subr.mxu0 0.0
    %663 = vmatpush1.msra.mxu0 0.0
    %664 = vmatprep.subr.mxu0 0.0
    %665 = vmatpush1.msra.mxu0 0.0
    %666 = vmatprep.subr.mxu0 0.0
    %667 = vmatpush1.msra.mxu0 0.0
    %668 = vmatprep.subr.mxu0 0.0
    %669 = vmatpush1.msra.mxu0 0.0
    %670 = vmatprep.subr.mxu0 0.0
    %671 = vmatpush1.msra.mxu0 0.0
    %672 = vmatprep.subr.mxu0 %v247
    %673 = vmatpush1.msra.mxu0 %v246
    %674 = vmatprep.subr.mxu0 %v245
    %675 = vmatpush1.msra.mxu0 %v244
    %676 = vmatprep.subr.mxu0 %v243
    %677 = vmatpush1.msra.mxu0 %v242
    %678 = vmatprep.subr.mxu0 %v241
    %679 = vmatpush1.msra.mxu0 %v240
    %680 = vmatprep.subr.mxu0 %v239
    %681 = vmatpush1.msra.mxu0 %v238
    %682 = vmatprep.subr.mxu0 %v237
    %683 = vmatpush1.msra.mxu0 %v236
    %684 = vmatprep.subr.mxu0 %v235
    %685 = vmatpush1.msra.mxu0 %v234
    %686 = vmatprep.subr.mxu0 %v233
    %687 = vmatpush1.msra.mxu0 %v232
    %688 = vmatprep.subr.mxu0 0.0
    %689 = vmatpush2.msra.mxu0 0.0
    %690 = vmatprep.subr.mxu0 0.0
    %691 = vmatpush2.msra.mxu0 0.0
    %692 = vmatprep.subr.mxu0 0.0
    %693 = vmatpush2.msra.mxu0 0.0
    %694 = vmatprep.subr.mxu0 0.0
    %695 = vmatpush2.msra.mxu0 0.0
    %696 = vmatprep.subr.mxu0 0.0
    %697 = vmatpush2.msra.mxu0 0.0
    %698 = vmatprep.subr.mxu0 0.0
    %699 = vmatpush2.msra.mxu0 0.0
    %700 = vmatprep.subr.mxu0 0.0
    %701 = vmatpush2.msra.mxu0 0.0
    %702 = vmatprep.subr.mxu0 0.0
    %703 = vmatpush2.msra.mxu0 0.0
    %704 = vmatprep.subr.mxu0 0.0
    %705 = vmatpush2.msra.mxu0 0.0
    %706 = vmatprep.subr.mxu0 0.0
    %707 = vmatpush2.msra.mxu0 0.0
    %708 = vmatprep.subr.mxu0 0.0
    %709 = vmatpush2.msra.mxu0 0.0
    %710 = vmatprep.subr.mxu0 0.0
    %711 = vmatpush2.msra.mxu0 0.0
    %712 = vmatprep.subr.mxu0 0.0
    %713 = vmatpush2.msra.mxu0 0.0
    %714 = vmatprep.subr.mxu0 0.0
    %715 = vmatpush2.msra.mxu0 0.0
    %716 = vmatprep.subr.mxu0 0.0
    %717 = vmatpush2.msra.mxu0 0.0
    %718 = vmatprep.subr.mxu0 0.0
    %719 = vmatpush2.msra.mxu0 0.0
    %720 = vmatprep.mubr.f32.mxu0 0.0
    %721 = vmatmul.mubr.f32.gmra.mxu0 %v654
    %v722 = vpop.f32.mrf.mxu0
    %v723 = vadd.f32 0.0, %v722
    %v724 = vpop.f32.mrf.mxu0
    %v725 = vadd.f32 0.0, %v724
    %726 = vdwg.mxu0
    %v727 = vadd.f32 %v651, %v723
    %v728 = vadd.f32 %v652, %v725
    %v729 = vtanh.pop %v727
    %v730 = vtanh.pop %v728
    %v731 = vmul.f32 %v729, 0.5
    %v732 = vmul.f32 %v730, 0.5
    %v733 = vadd.f32 %v731, 0.5
    %v734 = vadd.f32 %v732, 0.5
    %v735 = vmul.f32 %v733, %v644
    %737 = vrot.lane.b32.xlu0 %v730, 64
    %v738 = vpop.permute.xlu0 %737
    %v740 = vmul.f32 %v733, %v738
    %742 = vrot.lane.b32.xlu0 %v740, 64
    %v743 = vpop.permute.xlu0 %742
    %v745 = vadd.f32 %v735, %v743
    %v746 = vtanh.pop %v745
    %748 = vrot.lane.b32.xlu0 %v746, 64
    %v749 = vpop.permute.xlu0 %748
    %v751 = vmul.f32 %v734, %v749
    %v752 = vld [vmem:[#allocation2 + $0x50] sm:$0xff]
    %v753 = vld [vmem:[#allocation2 + $0x58] sm:$0xff]
    %v755 = vsel %vm248, %v751, 0
    %757 = vmatprep.subr.mxu0 0.0
    %758 = vmatpush1.msra.mxu0 0.0
    %759 = vmatprep.subr.mxu0 0.0
    %760 = vmatpush1.msra.mxu0 0.0
    %761 = vmatprep.subr.mxu0 0.0
    %762 = vmatpush1.msra.mxu0 0.0
    %763 = vmatprep.subr.mxu0 0.0
    %764 = vmatpush1.msra.mxu0 0.0
    %765 = vmatprep.subr.mxu0 0.0
    %766 = vmatpush1.msra.mxu0 0.0
    %767 = vmatprep.subr.mxu0 0.0
    %768 = vmatpush1.msra.mxu0 0.0
    %769 = vmatprep.subr.mxu0 0.0
    %770 = vmatpush1.msra.mxu0 0.0
    %771 = vmatprep.subr.mxu0 0.0
    %772 = vmatpush1.msra.mxu0 0.0
    %773 = vmatprep.subr.mxu0 %v247
    %774 = vmatpush1.msra.mxu0 %v246
    %775 = vmatprep.subr.mxu0 %v245
    %776 = vmatpush1.msra.mxu0 %v244
    %777 = vmatprep.subr.mxu0 %v243
    %778 = vmatpush1.msra.mxu0 %v242
    %779 = vmatprep.subr.mxu0 %v241
    %780 = vmatpush1.msra.mxu0 %v240
    %781 = vmatprep.subr.mxu0 %v239
    %782 = vmatpush1.msra.mxu0 %v238
    %783 = vmatprep.subr.mxu0 %v237
    %784 = vmatpush1.msra.mxu0 %v236
    %785 = vmatprep.subr.mxu0 %v235
    %786 = vmatpush1.msra.mxu0 %v234
    %787 = vmatprep.subr.mxu0 %v233
    %788 = vmatpush1.msra.mxu0 %v232
    %789 = vmatprep.subr.mxu0 0.0
    %790 = vmatpush2.msra.mxu0 0.0
    %791 = vmatprep.subr.mxu0 0.0
    %792 = vmatpush2.msra.mxu0 0.0
    %793 = vmatprep.subr.mxu0 0.0
    %794 = vmatpush2.msra.mxu0 0.0
    %795 = vmatprep.subr.mxu0 0.0
    %796 = vmatpush2.msra.mxu0 0.0
    %797 = vmatprep.subr.mxu0 0.0
    %798 = vmatpush2.msra.mxu0 0.0
    %799 = vmatprep.subr.mxu0 0.0
    %800 = vmatpush2.msra.mxu0 0.0
    %801 = vmatprep.subr.mxu0 0.0
    %802 = vmatpush2.msra.mxu0 0.0
    %803 = vmatprep.subr.mxu0 0.0
    %804 = vmatpush2.msra.mxu0 0.0
    %805 = vmatprep.subr.mxu0 0.0
    %806 = vmatpush2.msra.mxu0 0.0
    %807 = vmatprep.subr.mxu0 0.0
    %808 = vmatpush2.msra.mxu0 0.0
    %809 = vmatprep.subr.mxu0 0.0
    %810 = vmatpush2.msra.mxu0 0.0
    %811 = vmatprep.subr.mxu0 0.0
    %812 = vmatpush2.msra.mxu0 0.0
    %813 = vmatprep.subr.mxu0 0.0
    %814 = vmatpush2.msra.mxu0 0.0
    %815 = vmatprep.subr.mxu0 0.0
    %816 = vmatpush2.msra.mxu0 0.0
    %817 = vmatprep.subr.mxu0 0.0
    %818 = vmatpush2.msra.mxu0 0.0
    %819 = vmatprep.subr.mxu0 0.0
    %820 = vmatpush2.msra.mxu0 0.0
    %821 = vmatprep.mubr.f32.mxu0 0.0
    %822 = vmatmul.mubr.f32.gmra.mxu0 %v755
    %v823 = vpop.f32.mrf.mxu0
    %v824 = vadd.f32 0.0, %v823
    %v825 = vpop.f32.mrf.mxu0
    %v826 = vadd.f32 0.0, %v825
    %827 = vdwg.mxu0
    %v828 = vadd.f32 %v752, %v824
    %v829 = vadd.f32 %v753, %v826
    %v830 = vtanh.pop %v828
    %v831 = vtanh.pop %v829
    %v832 = vmul.f32 %v830, 0.5
    %v833 = vmul.f32 %v831, 0.5
    %v834 = vadd.f32 %v832, 0.5
    %v835 = vadd.f32 %v833, 0.5
    %v836 = vmul.f32 %v834, %v745
    %838 = vrot.lane.b32.xlu0 %v831, 64
    %v839 = vpop.permute.xlu0 %838
    %v841 = vmul.f32 %v834, %v839
    %843 = vrot.lane.b32.xlu0 %v841, 64
    %v844 = vpop.permute.xlu0 %843
    %v846 = vadd.f32 %v836, %v844
    %v847 = vtanh.pop %v846
    %849 = vrot.lane.b32.xlu0 %v847, 64
    %v850 = vpop.permute.xlu0 %849
    %v852 = vmul.f32 %v835, %v850
    %v853 = vld [vmem:[#allocation2 + $0x60] sm:$0xff]
    %v854 = vld [vmem:[#allocation2 + $0x68] sm:$0xff]
    %v856 = vsel %vm248, %v852, 0
    %858 = vmatprep.subr.mxu0 0.0
    %859 = vmatpush1.msra.mxu0 0.0
    %860 = vmatprep.subr.mxu0 0.0
    %861 = vmatpush1.msra.mxu0 0.0
    %862 = vmatprep.subr.mxu0 0.0
    %863 = vmatpush1.msra.mxu0 0.0
    %864 = vmatprep.subr.mxu0 0.0
    %865 = vmatpush1.msra.mxu0 0.0
    %866 = vmatprep.subr.mxu0 0.0
    %867 = vmatpush1.msra.mxu0 0.0
    %868 = vmatprep.subr.mxu0 0.0
    %869 = vmatpush1.msra.mxu0 0.0
    %870 = vmatprep.subr.mxu0 0.0
    %871 = vmatpush1.msra.mxu0 0.0
    %872 = vmatprep.subr.mxu0 0.0
    %873 = vmatpush1.msra.mxu0 0.0
    %874 = vmatprep.subr.mxu0 %v247
    %875 = vmatpush1.msra.mxu0 %v246
    %876 = vmatprep.subr.mxu0 %v245
    %877 = vmatpush1.msra.mxu0 %v244
    %878 = vmatprep.subr.mxu0 %v243
    %879 = vmatpush1.msra.mxu0 %v242
    %880 = vmatprep.subr.mxu0 %v241
    %881 = vmatpush1.msra.mxu0 %v240
    %882 = vmatprep.subr.mxu0 %v239
    %883 = vmatpush1.msra.mxu0 %v238
    %884 = vmatprep.subr.mxu0 %v237
    %885 = vmatpush1.msra.mxu0 %v236
    %886 = vmatprep.subr.mxu0 %v235
    %887 = vmatpush1.msra.mxu0 %v234
    %888 = vmatprep.subr.mxu0 %v233
    %889 = vmatpush1.msra.mxu0 %v232
    %890 = vmatprep.subr.mxu0 0.0
    %891 = vmatpush2.msra.mxu0 0.0
    %892 = vmatprep.subr.mxu0 0.0
    %893 = vmatpush2.msra.mxu0 0.0
    %894 = vmatprep.subr.mxu0 0.0
    %895 = vmatpush2.msra.mxu0 0.0
    %896 = vmatprep.subr.mxu0 0.0
    %897 = vmatpush2.msra.mxu0 0.0
    %898 = vmatprep.subr.mxu0 0.0
    %899 = vmatpush2.msra.mxu0 0.0
    %900 = vmatprep.subr.mxu0 0.0
    %901 = vmatpush2.msra.mxu0 0.0
    %902 = vmatprep.subr.mxu0 0.0
    %903 = vmatpush2.msra.mxu0 0.0
    %904 = vmatprep.subr.mxu0 0.0
    %905 = vmatpush2.msra.mxu0 0.0
    %906 = vmatprep.subr.mxu0 0.0
    %907 = vmatpush2.msra.mxu0 0.0
    %908 = vmatprep.subr.mxu0 0.0
    %909 = vmatpush2.msra.mxu0 0.0
    %910 = vmatprep.subr.mxu0 0.0
    %911 = vmatpush2.msra.mxu0 0.0
    %912 = vmatprep.subr.mxu0 0.0
    %913 = vmatpush2.msra.mxu0 0.0
    %914 = vmatprep.subr.mxu0 0.0
    %915 = vmatpush2.msra.mxu0 0.0
    %916 = vmatprep.subr.mxu0 0.0
    %917 = vmatpush2.msra.mxu0 0.0
    %918 = vmatprep.subr.mxu0 0.0
    %919 = vmatpush2.msra.mxu0 0.0
    %920 = vmatprep.subr.mxu0 0.0
    %921 = vmatpush2.msra.mxu0 0.0
    %922 = vmatprep.mubr.f32.mxu0 0.0
    %923 = vmatmul.mubr.f32.gmra.mxu0 %v856
    %v924 = vpop.f32.mrf.mxu0
    %v925 = vadd.f32 0.0, %v924
    %v926 = vpop.f32.mrf.mxu0
    %v927 = vadd.f32 0.0, %v926
    %928 = vdwg.mxu0
    %v929 = vadd.f32 %v853, %v925
    %v930 = vadd.f32 %v854, %v927
    %v931 = vtanh.pop %v929
    %v932 = vtanh.pop %v930
    %v933 = vmul.f32 %v931, 0.5
    %v934 = vmul.f32 %v932, 0.5
    %v935 = vadd.f32 %v933, 0.5
    %v936 = vadd.f32 %v934, 0.5
    %v937 = vmul.f32 %v935, %v846
    %939 = vrot.lane.b32.xlu0 %v932, 64
    %v940 = vpop.permute.xlu0 %939
    %v942 = vmul.f32 %v935, %v940
    %944 = vrot.lane.b32.xlu0 %v942, 64
    %v945 = vpop.permute.xlu0 %944
    %v947 = vadd.f32 %v937, %v945
    %v948 = vtanh.pop %v947
    %950 = vrot.lane.b32.xlu0 %v948, 64
    %v951 = vpop.permute.xlu0 %950
    %v953 = vmul.f32 %v936, %v951
    %v954 = vld [vmem:[#allocation2 + $0x70] sm:$0xff]
    %v955 = vld [vmem:[#allocation2 + $0x78] sm:$0xff]
    %v957 = vsel %vm248, %v953, 0
    %959 = vmatprep.subr.mxu0 0.0
    %960 = vmatpush1.msra.mxu0 0.0
    %961 = vmatprep.subr.mxu0 0.0
    %962 = vmatpush1.msra.mxu0 0.0
    %963 = vmatprep.subr.mxu0 0.0
    %964 = vmatpush1.msra.mxu0 0.0
    %965 = vmatprep.subr.mxu0 0.0
    %966 = vmatpush1.msra.mxu0 0.0
    %967 = vmatprep.subr.mxu0 0.0
    %968 = vmatpush1.msra.mxu0 0.0
    %969 = vmatprep.subr.mxu0 0.0
    %970 = vmatpush1.msra.mxu0 0.0
    %971 = vmatprep.subr.mxu0 0.0
    %972 = vmatpush1.msra.mxu0 0.0
    %973 = vmatprep.subr.mxu0 0.0
    %974 = vmatpush1.msra.mxu0 0.0
    %975 = vmatprep.subr.mxu0 %v247
    %976 = vmatpush1.msra.mxu0 %v246
    %977 = vmatprep.subr.mxu0 %v245
    %978 = vmatpush1.msra.mxu0 %v244
    %979 = vmatprep.subr.mxu0 %v243
    %980 = vmatpush1.msra.mxu0 %v242
    %981 = vmatprep.subr.mxu0 %v241
    %982 = vmatpush1.msra.mxu0 %v240
    %983 = vmatprep.subr.mxu0 %v239
    %984 = vmatpush1.msra.mxu0 %v238
    %985 = vmatprep.subr.mxu0 %v237
    %986 = vmatpush1.msra.mxu0 %v236
    %987 = vmatprep.subr.mxu0 %v235
    %988 = vmatpush1.msra.mxu0 %v234
    %989 = vmatprep.subr.mxu0 %v233
    %990 = vmatpush1.msra.mxu0 %v232
    %991 = vmatprep.subr.mxu0 0.0
    %992 = vmatpush2.msra.mxu0 0.0
    %993 = vmatprep.subr.mxu0 0.0
    %994 = vmatpush2.msra.mxu0 0.0
    %995 = vmatprep.subr.mxu0 0.0
    %996 = vmatpush2.msra.mxu0 0.0
    %997 = vmatprep.subr.mxu0 0.0
    %998 = vmatpush2.msra.mxu0 0.0
    %999 = vmatprep.subr.mxu0 0.0
    %1000 = vmatpush2.msra.mxu0 0.0
    %1001 = vmatprep.subr.mxu0 0.0
    %1002 = vmatpush2.msra.mxu0 0.0
    %1003 = vmatprep.subr.mxu0 0.0
    %1004 = vmatpush2.msra.mxu0 0.0
    %1005 = vmatprep.subr.mxu0 0.0
    %1006 = vmatpush2.msra.mxu0 0.0
    %1007 = vmatprep.subr.mxu0 0.0
    %1008 = vmatpush2.msra.mxu0 0.0
    %1009 = vmatprep.subr.mxu0 0.0
    %1010 = vmatpush2.msra.mxu0 0.0
    %1011 = vmatprep.subr.mxu0 0.0
    %1012 = vmatpush2.msra.mxu0 0.0
    %1013 = vmatprep.subr.mxu0 0.0
    %1014 = vmatpush2.msra.mxu0 0.0
    %1015 = vmatprep.subr.mxu0 0.0
    %1016 = vmatpush2.msra.mxu0 0.0
    %1017 = vmatprep.subr.mxu0 0.0
    %1018 = vmatpush2.msra.mxu0 0.0
    %1019 = vmatprep.subr.mxu0 0.0
    %1020 = vmatpush2.msra.mxu0 0.0
    %1021 = vmatprep.subr.mxu0 0.0
    %1022 = vmatpush2.msra.mxu0 0.0
    %1023 = vmatprep.mubr.f32.mxu0 0.0
    %1024 = vmatmul.mubr.f32.gmra.mxu0 %v957
    %v1025 = vpop.f32.mrf.mxu0
    %v1026 = vadd.f32 0.0, %v1025
    %v1027 = vpop.f32.mrf.mxu0
    %v1028 = vadd.f32 0.0, %v1027
    %1029 = vdwg.mxu0
    %v1030 = vadd.f32 %v954, %v1026
    %v1031 = vadd.f32 %v955, %v1028
    %v1032 = vtanh.pop %v1030
    %v1033 = vtanh.pop %v1031
    %v1034 = vmul.f32 %v1032, 0.5
    %v1035 = vmul.f32 %v1033, 0.5
    %v1036 = vadd.f32 %v1034, 0.5
    %v1037 = vadd.f32 %v1035, 0.5
    %v1038 = vmul.f32 %v1036, %v947
    %1040 = vrot.lane.b32.xlu0 %v1033, 64
    %v1041 = vpop.permute.xlu0 %1040
    %v1043 = vmul.f32 %v1036, %v1041
    %1045 = vrot.lane.b32.xlu0 %v1043, 64
    %v1046 = vpop.permute.xlu0 %1045
    %v1048 = vadd.f32 %v1038, %v1046
    %v1049 = vtanh.pop %v1048
    %1051 = vrot.lane.b32.xlu0 %v1049, 64
    %v1052 = vpop.permute.xlu0 %1051
    %v1054 = vmul.f32 %v1037, %v1052
    %v1055 = vld [vmem:[%s4] sm:$0xff]
    %v1056 = vld [vmem:[%s4 + $0x8] sm:$0xff]
    %v1057 = vld [vmem:[%s4 + $0x10] sm:$0xff]
    %v1058 = vld [vmem:[%s4 + $0x18] sm:$0xff]
    %v1059 = vld [vmem:[%s4 + $0x20] sm:$0xff]
    %v1060 = vld [vmem:[%s4 + $0x28] sm:$0xff]
    %v1061 = vld [vmem:[%s4 + $0x30] sm:$0xff]
    %v1062 = vld [vmem:[%s4 + $0x38] sm:$0xff]
    %v1063 = vld [vmem:[%s5] sm:$0x1]
    %v1065 = vlaneseq
    %v1066 = vshrl.u32 %v1065, 7
    %v1067 = vsub.s32 0, %v1066
    %v1068 = vrot.slane %v1063, %v1067
    %v1071 = vsel %vm248, %v1054, 0
    %1073 = vmatprep.subr.mxu0 0.0
    %1074 = vmatpush1.msra.mxu0 0.0
    %1075 = vmatprep.subr.mxu0 0.0
    %1076 = vmatpush1.msra.mxu0 0.0
    %1077 = vmatprep.subr.mxu0 0.0
    %1078 = vmatpush1.msra.mxu0 0.0
    %1079 = vmatprep.subr.mxu0 0.0
    %1080 = vmatpush1.msra.mxu0 0.0
    %1081 = vmatprep.subr.mxu0 0.0
    %1082 = vmatpush1.msra.mxu0 0.0
    %1083 = vmatprep.subr.mxu0 0.0
    %1084 = vmatpush1.msra.mxu0 0.0
    %1085 = vmatprep.subr.mxu0 0.0
    %1086 = vmatpush1.msra.mxu0 0.0
    %1087 = vmatprep.subr.mxu0 0.0
    %1088 = vmatpush1.msra.mxu0 0.0
    %1089 = vmatprep.subr.mxu0 0.0
    %1090 = vmatpush1.msra.mxu0 %v1062
    %1091 = vmatprep.subr.mxu0 0.0
    %1092 = vmatpush1.msra.mxu0 %v1061
    %1093 = vmatprep.subr.mxu0 0.0
    %1094 = vmatpush1.msra.mxu0 %v1060
    %1095 = vmatprep.subr.mxu0 0.0
    %1096 = vmatpush1.msra.mxu0 %v1059
    %1097 = vmatprep.subr.mxu0 0.0
    %1098 = vmatpush1.msra.mxu0 %v1058
    %1099 = vmatprep.subr.mxu0 0.0
    %1100 = vmatpush1.msra.mxu0 %v1057
    %1101 = vmatprep.subr.mxu0 0.0
    %1102 = vmatpush1.msra.mxu0 %v1056
    %1103 = vmatprep.subr.mxu0 0.0
    %1104 = vmatpush1.msra.mxu0 %v1055
    %1105 = vmatprep.subr.mxu0 0.0
    %1106 = vmatpush2.msra.mxu0 0.0
    %1107 = vmatprep.subr.mxu0 0.0
    %1108 = vmatpush2.msra.mxu0 0.0
    %1109 = vmatprep.subr.mxu0 0.0
    %1110 = vmatpush2.msra.mxu0 0.0
    %1111 = vmatprep.subr.mxu0 0.0
    %1112 = vmatpush2.msra.mxu0 0.0
    %1113 = vmatprep.subr.mxu0 0.0
    %1114 = vmatpush2.msra.mxu0 0.0
    %1115 = vmatprep.subr.mxu0 0.0
    %1116 = vmatpush2.msra.mxu0 0.0
    %1117 = vmatprep.subr.mxu0 0.0
    %1118 = vmatpush2.msra.mxu0 0.0
    %1119 = vmatprep.subr.mxu0 0.0
    %1120 = vmatpush2.msra.mxu0 0.0
    %1121 = vmatprep.subr.mxu0 0.0
    %1122 = vmatpush2.msra.mxu0 0.0
    %1123 = vmatprep.subr.mxu0 0.0
    %1124 = vmatpush2.msra.mxu0 0.0
    %1125 = vmatprep.subr.mxu0 0.0
    %1126 = vmatpush2.msra.mxu0 0.0
    %1127 = vmatprep.subr.mxu0 0.0
    %1128 = vmatpush2.msra.mxu0 0.0
    %1129 = vmatprep.subr.mxu0 0.0
    %1130 = vmatpush2.msra.mxu0 0.0
    %1131 = vmatprep.subr.mxu0 0.0
    %1132 = vmatpush2.msra.mxu0 0.0
    %1133 = vmatprep.subr.mxu0 0.0
    %1134 = vmatpush2.msra.mxu0 0.0
    %1135 = vmatprep.subr.mxu0 0.0
    %1136 = vmatpush2.msra.mxu0 0.0
    %1137 = vmatprep.mubr.f32.mxu0 0.0
    %1138 = vmatmul.mubr.f32.gmra.mxu0 %v1071
    %v1139 = vpop.f32.mrf.mxu0
    %v1140 = vadd.f32 %v1068, %v1139
    %v1141 = vpop.f32.mrf.mxu0
    %1142 = vdwg.mxu0
    %v1143 = vmax.f32 %v1140, 0.0
    %v1144 = vld [vmem:[#allocation3] sm:$0xff]
    %v1145 = vld [vmem:[#allocation3 + $0x8] sm:$0xff]
    %v1146 = vld [vmem:[#allocation3 + $0x10] sm:$0xff]
    %v1147 = vld [vmem:[#allocation3 + $0x18] sm:$0xff]
    %v1148 = vld [vmem:[%s7] sm:$0x1]
    %v1150 = vlaneseq
    %v1151 = vshrl.u32 %v1150, 7
    %v1152 = vsub.s32 0, %v1151
    %v1153 = vrot.slane %v1148, %v1152
    %vm1155 = vcmask 261120
    %v1157 = vsel %vm1155, %v1143, 0
    %1159 = vmatprep.subr.mxu0 0.0
    %1160 = vmatpush1.msra.mxu0 0.0
    %1161 = vmatprep.subr.mxu0 0.0
    %1162 = vmatpush1.msra.mxu0 0.0
    %1163 = vmatprep.subr.mxu0 0.0
    %1164 = vmatpush1.msra.mxu0 0.0
    %1165 = vmatprep.subr.mxu0 0.0
    %1166 = vmatpush1.msra.mxu0 0.0
    %1167 = vmatprep.subr.mxu0 0.0
    %1168 = vmatpush1.msra.mxu0 0.0
    %1169 = vmatprep.subr.mxu0 0.0
    %1170 = vmatpush1.msra.mxu0 0.0
    %1171 = vmatprep.subr.mxu0 0.0
    %1172 = vmatpush1.msra.mxu0 0.0
    %1173 = vmatprep.subr.mxu0 0.0
    %1174 = vmatpush1.msra.mxu0 0.0
    %1175 = vmatprep.subr.mxu0 0.0
    %1176 = vmatpush1.msra.mxu0 0.0
    %1177 = vmatprep.subr.mxu0 0.0
    %1178 = vmatpush1.msra.mxu0 0.0
    %1179 = vmatprep.subr.mxu0 0.0
    %1180 = vmatpush1.msra.mxu0 0.0
    %1181 = vmatprep.subr.mxu0 0.0
    %1182 = vmatpush1.msra.mxu0 0.0
    %1183 = vmatprep.subr.mxu0 0.0
    %1184 = vmatpush1.msra.mxu0 %v1147
    %1185 = vmatprep.subr.mxu0 0.0
    %1186 = vmatpush1.msra.mxu0 %v1146
    %1187 = vmatprep.subr.mxu0 0.0
    %1188 = vmatpush1.msra.mxu0 %v1145
    %1189 = vmatprep.subr.mxu0 0.0
    %1190 = vmatpush1.msra.mxu0 %v1144
    %1191 = vmatprep.subr.mxu0 0.0
    %1192 = vmatpush2.msra.mxu0 0.0
    %1193 = vmatprep.subr.mxu0 0.0
    %1194 = vmatpush2.msra.mxu0 0.0
    %1195 = vmatprep.subr.mxu0 0.0
    %1196 = vmatpush2.msra.mxu0 0.0
    %1197 = vmatprep.subr.mxu0 0.0
    %1198 = vmatpush2.msra.mxu0 0.0
    %1199 = vmatprep.subr.mxu0 0.0
    %1200 = vmatpush2.msra.mxu0 0.0
    %1201 = vmatprep.subr.mxu0 0.0
    %1202 = vmatpush2.msra.mxu0 0.0
    %1203 = vmatprep.subr.mxu0 0.0
    %1204 = vmatpush2.msra.mxu0 0.0
    %1205 = vmatprep.subr.mxu0 0.0
    %1206 = vmatpush2.msra.mxu0 0.0
    %1207 = vmatprep.subr.mxu0 0.0
    %1208 = vmatpush2.msra.mxu0 0.0
    %1209 = vmatprep.subr.mxu0 0.0
    %1210 = vmatpush2.msra.mxu0 0.0
    %1211 = vmatprep.subr.mxu0 0.0
    %1212 = vmatpush2.msra.mxu0 0.0
    %1213 = vmatprep.subr.mxu0 0.0
    %1214 = vmatpush2.msra.mxu0 0.0
    %1215 = vmatprep.subr.mxu0 0.0
    %1216 = vmatpush2.msra.mxu0 0.0
    %1217 = vmatprep.subr.mxu0 0.0
    %1218 = vmatpush2.msra.mxu0 0.0
    %1219 = vmatprep.subr.mxu0 0.0
    %1220 = vmatpush2.msra.mxu0 0.0
    %1221 = vmatprep.subr.mxu0 0.0
    %1222 = vmatpush2.msra.mxu0 0.0
    %1223 = vmatprep.mubr.f32.mxu0 0.0
    %1224 = vmatmul.mubr.f32.gmra.mxu0 %v1157
    %v1225 = vpop.f32.mrf.mxu0
    %v1226 = vadd.f32 %v1153, %v1225
    %v1227 = vpop.f32.mrf.mxu0
    %1228 = vdwg.mxu0
    %v1229 = vmax.f32 %v1226, 0.0
    %v1230 = vld [vmem:[%s8] sm:$0xff]
    %v1231 = vld [vmem:[%s8 + $0x8] sm:$0xff]
    %v1232 = vld [vmem:[%s8 + $0x10] sm:$0xff]
    %v1233 = vld [vmem:[%s8 + $0x18] sm:$0xff]
    %v1234 = vld [vmem:[%s9] sm:$0x1]
    %v1236 = vlaneseq
    %v1237 = vshrl.u32 %v1236, 7
    %v1238 = vsub.s32 0, %v1237
    %v1239 = vrot.slane %v1234, %v1238
    %v1242 = vsel %vm1155, %v1229, 0
    %1244 = vmatprep.subr.mxu0 0.0
    %1245 = vmatpush1.msra.mxu0 0.0
    %1246 = vmatprep.subr.mxu0 0.0
    %1247 = vmatpush1.msra.mxu0 0.0
    %1248 = vmatprep.subr.mxu0 0.0
    %1249 = vmatpush1.msra.mxu0 0.0
    %1250 = vmatprep.subr.mxu0 0.0
    %1251 = vmatpush1.msra.mxu0 0.0
    %1252 = vmatprep.subr.mxu0 0.0
    %1253 = vmatpush1.msra.mxu0 0.0
    %1254 = vmatprep.subr.mxu0 0.0
    %1255 = vmatpush1.msra.mxu0 0.0
    %1256 = vmatprep.subr.mxu0 0.0
    %1257 = vmatpush1.msra.mxu0 0.0
    %1258 = vmatprep.subr.mxu0 0.0
    %1259 = vmatpush1.msra.mxu0 0.0
    %1260 = vmatprep.subr.mxu0 0.0
    %1261 = vmatpush1.msra.mxu0 0.0
    %1262 = vmatprep.subr.mxu0 0.0
    %1263 = vmatpush1.msra.mxu0 0.0
    %1264 = vmatprep.subr.mxu0 0.0
    %1265 = vmatpush1.msra.mxu0 0.0
    %1266 = vmatprep.subr.mxu0 0.0
    %1267 = vmatpush1.msra.mxu0 0.0
    %1268 = vmatprep.subr.mxu0 0.0
    %1269 = vmatpush1.msra.mxu0 %v1233
    %1270 = vmatprep.subr.mxu0 0.0
    %1271 = vmatpush1.msra.mxu0 %v1232
    %1272 = vmatprep.subr.mxu0 0.0
    %1273 = vmatpush1.msra.mxu0 %v1231
    %1274 = vmatprep.subr.mxu0 0.0
    %1275 = vmatpush1.msra.mxu0 %v1230
    %1276 = vmatprep.subr.mxu0 0.0
    %1277 = vmatpush2.msra.mxu0 0.0
    %1278 = vmatprep.subr.mxu0 0.0
    %1279 = vmatpush2.msra.mxu0 0.0
    %1280 = vmatprep.subr.mxu0 0.0
    %1281 = vmatpush2.msra.mxu0 0.0
    %1282 = vmatprep.subr.mxu0 0.0
    %1283 = vmatpush2.msra.mxu0 0.0
    %1284 = vmatprep.subr.mxu0 0.0
    %1285 = vmatpush2.msra.mxu0 0.0
    %1286 = vmatprep.subr.mxu0 0.0
    %1287 = vmatpush2.msra.mxu0 0.0
    %1288 = vmatprep.subr.mxu0 0.0
    %1289 = vmatpush2.msra.mxu0 0.0
    %1290 = vmatprep.subr.mxu0 0.0
    %1291 = vmatpush2.msra.mxu0 0.0
    %1292 = vmatprep.subr.mxu0 0.0
    %1293 = vmatpush2.msra.mxu0 0.0
    %1294 = vmatprep.subr.mxu0 0.0
    %1295 = vmatpush2.msra.mxu0 0.0
    %1296 = vmatprep.subr.mxu0 0.0
    %1297 = vmatpush2.msra.mxu0 0.0
    %1298 = vmatprep.subr.mxu0 0.0
    %1299 = vmatpush2.msra.mxu0 0.0
    %1300 = vmatprep.subr.mxu0 0.0
    %1301 = vmatpush2.msra.mxu0 0.0
    %1302 = vmatprep.subr.mxu0 0.0
    %1303 = vmatpush2.msra.mxu0 0.0
    %1304 = vmatprep.subr.mxu0 0.0
    %1305 = vmatpush2.msra.mxu0 0.0
    %1306 = vmatprep.subr.mxu0 0.0
    %1307 = vmatpush2.msra.mxu0 0.0
    %1308 = vmatprep.mubr.f32.mxu0 0.0
    %1309 = vmatmul.mubr.f32.gmra.mxu0 %v1242
    %v1310 = vpop.f32.mrf.mxu0
    %v1311 = vadd.f32 %v1239, %v1310
    %v1312 = vpop.f32.mrf.mxu0
    %1313 = vdwg.mxu0
    %vm1314 = vcmask 64512
    %1315 = vst.msk [vmem:[#allocation6] sm:$0xff] %vm1314, %v1311
    // Predicated region
    $region46: #{tpu_custom_call.1} parent=1 // pred_check
      _
    $region47: #{tpu_custom_call.1} parent=1 // pred_check_branch
      %1317 = sbr.rel (0) target = $region49
    $region48: #{tpu_custom_call.1} parent=1 // pred_region
      %s1319 = ssub.s32 128, 128
      %1320 = vsyncadd [#allocation5], %s1319
      %s1322 = sshll.u32 [#allocation6], 4
      %s1323 = int_to_ptr.vmem [resolvable:$true] %s1322
      %1325 = dma.vmem_to_hbm [thread:$0]  %s1323, 128, %s10, [#allocation5]
    $region49: #{tpu_custom_call.1} parent=1 // pred_fallthru
      _
    // Predicated region
    $region50: #{tpu_custom_call.1} parent=1 // pred_check
      _
    $region51: #{tpu_custom_call.1} parent=1 // pred_check_branch
      %1327 = sbr.rel (0) target = $region53
    $region52: #{tpu_custom_call.1} parent=1 // pred_region
      %1328 = dma.done [#allocation5], 128
    $region53: #{tpu_custom_call.1} parent=1 // pred_fallthru
      _
    %1329 = vsyncpa [#allocation4], 1
    %1330 = vsyncpa [#allocation5], 1

</llo_original>
